<compile_context>
chip_gen: v6e
topology: v6e:2x2x1
jax: 0.10.0
libtpu: 0.0.40
codegen_flags: <defaults>
</compile_context>

<pallas_src>
import math

import jax
import jax.numpy as jnp
from jax import lax
from jax.experimental import pallas as pl
from jax.experimental.pallas import tpu as pltpu


def _gelu(x):
    # matches the torch tanh-approx gelu in the reference module
    return 0.5 * x * (1.0 + jnp.tanh(math.sqrt(2.0 / math.pi) * (x + 0.044715 * x ** 3)))


def _layernorm(x, g, b, eps=1e-5):
    # OpenAI-style layernorm (epsilon inside the sqrt), biased variance.
    # rsqrt goes to the EUP instead of a VPU divide.
    u = jnp.mean(x, axis=-1, keepdims=True)
    s = jnp.mean((x - u) ** 2, axis=-1, keepdims=True)
    return g * ((x - u) * lax.rsqrt(s + eps)) + b


def make_block_kernel(S, nx, n_head, tq):
    dh = nx // n_head
    f32 = jnp.float32

    def kernel(xf_ref, mask_ref,
               wq_ref, bq_ref, wk_ref, bk_ref, wv_ref, bv_ref,
               wpr_ref, bpr_ref, ln1g_ref, ln1b_ref,
               wfc_ref, bfc_ref, wp2_ref, bp2_ref,
               ln2g_ref, ln2b_ref,
               o_ref,
               k_ref, v_ref, ao_ref):
        qi = pl.program_id(1)
        mm_dt = wq_ref.dtype        # matmul operand dtype (f32 or bf16)

        # ---- K/V projections: ONCE per batch element (q axis is "arbitrary",
        #      so the scratch persists across the query tiles of this batch). ----
        @pl.when(qi == 0)
        def _():
            xf = xf_ref[0].astype(mm_dt)                       # [S, nx]
            k_ref[...] = (jnp.dot(xf, wk_ref[...], preferred_element_type=f32)
                          + bk_ref[...]).astype(k_ref.dtype)   # [S, nx]
            v_ref[...] = (jnp.dot(xf, wv_ref[...], preferred_element_type=f32)
                          + bv_ref[...]).astype(v_ref.dtype)   # [S, nx]

        # ---- query tile sliced from the (per-batch constant) full-sequence block ----
        q_start = pl.multiple_of(qi * tq, tq)
        xq = xf_ref[0, pl.ds(q_start, tq), :]                  # [tq, nx] f32
        q = jnp.dot(xq.astype(mm_dt), wq_ref[...],
                    preferred_element_type=f32) + bq_ref[...]  # [tq, nx] (scale folded)

        # ---- causal * sequence mask for this query tile (single boolean select) ----
        q_pos = qi * tq + lax.broadcasted_iota(jnp.int32, (tq, S), 0)
        k_pos = lax.broadcasted_iota(jnp.int32, (tq, S), 1)
        bmask = (k_pos <= q_pos) & (mask_ref[0] > 0.0)         # [tq, S] bool

        # ---- per-head attention; head outputs land in ao_ref (merge_heads layout),
        #      c_proj is one full-K matmul after the loop. Scratch stores bound
        #      per-head live ranges. ----
        for h in range(n_head):
            lo = h * dh
            q_h = q[:, lo:lo + dh].astype(mm_dt)               # [tq, dh]
            k_h = k_ref[:, lo:lo + dh]                         # [S, dh]
            v_h = v_ref[:, lo:lo + dh]                         # [S, dh]

            # q_h @ k_h^T without materializing a transpose.
            s_h = lax.dot_general(q_h, k_h, (((1,), (1,)), ((), ())),
                                  preferred_element_type=f32)  # [tq, S]
            s_h = jnp.where(bmask, s_h, -1e9)

            m = jnp.max(s_h, axis=-1, keepdims=True)
            p = jnp.exp(s_h - m)
            den = jnp.sum(p, axis=-1, keepdims=True)           # [tq, 1]

            # PV with the UN-normalized probabilities; normalize the [tq, dh]
            # result instead of the [tq, S] matrix.
            ao = jnp.dot(p.astype(mm_dt), v_h,
                         preferred_element_type=f32)           # [tq, dh]
            r = pl.reciprocal(den, approx=True)                # EUP
            r = r * (2.0 - den * r)                            # one Newton step -> f32 accuracy
            ao_ref[:, lo:lo + dh] = ao * r

        # ---- c_proj: one full-K [tq,nx] x [nx,nx] matmul ----
        a = jnp.dot(ao_ref[...].astype(mm_dt), wpr_ref[...],
                    preferred_element_type=f32) + bpr_ref[...]

        # ---- residual + LN1 ----
        n1 = _layernorm(xq + a, ln1g_ref[...], ln1b_ref[...])

        # ---- MLP: c_fc (nx -> 4nx), gelu, c_proj (4nx -> nx) ----
        hmid = _gelu(jnp.dot(n1.astype(mm_dt), wfc_ref[...],
                             preferred_element_type=f32) + bfc_ref[...])
        h2 = jnp.dot(hmid.astype(mm_dt), wp2_ref[...],
                     preferred_element_type=f32) + bp2_ref[...]

        # ---- residual + LN2 ----
        o_ref[0] = _layernorm(n1 + h2, ln2g_ref[...], ln2b_ref[...]).astype(o_ref.dtype)

    return kernel


def _vmem_limit_bytes():
    # Per-generation limit: leave headroom below the physical VMEM
    # (64 MiB/TC on v7x, 128 MiB on v5e/v6e).  Safe fallback if the query fails.
    cap = None
    try:
        cap = getattr(pltpu.get_tpu_info(), "vmem_capacity_bytes", None)
    except Exception:
        cap = None
    if not cap:
        cap = 64 * 1024 * 1024
    return min(int(cap * 0.85), 100 * 1024 * 1024)


def block_forward(x, sequence_mask, params, n_head, scale=False, q_tile=256,
                  matmul_dtype=jnp.float32):
    """q_tile: 256 matches v6e/v7x's 256-wide MXU; use 128 on v5e.
    matmul_dtype: set jnp.bfloat16 for the native MXU path on v5e/v6e/v7x
    (f32 accumulation is kept); default f32 preserves the tight tolerance."""
    B, S, nx = x.shape
    dh = nx // n_head

    # Query tiling: tq rows of the sequence per grid step.
    tq = S if S <= q_tile else q_tile
    assert S % tq == 0, "S must be divisible by the query tile size"
    nq = S // tq

    mask3 = sequence_mask.reshape(B, 1, S).astype(jnp.float32)

    # Split the fused QKV weights at trace time and fold the attention scale
    # (if any) into the Q projection.
    wqkv, bqkv = params["wqkv"], params["bqkv"]
    wq, wk, wv = wqkv[:, :nx], wqkv[:, nx:2 * nx], wqkv[:, 2 * nx:]
    bq, bk, bv = bqkv[:, :nx], bqkv[:, nx:2 * nx], bqkv[:, 2 * nx:]
    if scale:
        inv = 1.0 / math.sqrt(dh)
        wq = wq * inv
        bq = bq * inv

    cast = lambda w: w.astype(matmul_dtype)
    wq, wk, wv = cast(wq), cast(wk), cast(wv)
    wpr = cast(params["wpr"])
    wfc = cast(params["wfc"])
    wp2 = cast(params["wp2"])

    w2d = lambda shape: pl.BlockSpec(shape, lambda b, qi: (0, 0))

    kernel = make_block_kernel(S, nx, n_head, tq)
    return pl.pallas_call(
        kernel,
        out_shape=jax.ShapeDtypeStruct((B, S, nx), jnp.float32),
        grid=(B, nq),
        in_specs=[
            pl.BlockSpec((1, S, nx), lambda b, qi: (b, 0, 0)),   # x (full seq; q tile sliced in-kernel)
            pl.BlockSpec((1, 1, S), lambda b, qi: (b, 0, 0)),    # sequence_mask
            w2d((nx, nx)),        # wq (scale folded)
            w2d((1, nx)),         # bq
            w2d((nx, nx)),        # wk
            w2d((1, nx)),         # bk
            w2d((nx, nx)),        # wv
            w2d((1, nx)),         # bv
            w2d((nx, nx)),        # w_proj (attn), un-split
            w2d((1, nx)),         # b_proj (attn)
            w2d((1, nx)),         # ln1 gamma
            w2d((1, nx)),         # ln1 beta
            w2d((nx, 4 * nx)),    # w_fc
            w2d((1, 4 * nx)),     # b_fc
            w2d((4 * nx, nx)),    # w_proj (mlp)
            w2d((1, nx)),         # b_proj (mlp)
            w2d((1, nx)),         # ln2 gamma
            w2d((1, nx)),         # ln2 beta
        ],
        out_specs=pl.BlockSpec((1, tq, nx), lambda b, qi: (b, qi, 0)),
        scratch_shapes=[
            pltpu.VMEM((S, nx), matmul_dtype),   # K cache (per batch element)
            pltpu.VMEM((S, nx), matmul_dtype),   # V cache (per batch element)
            pltpu.VMEM((tq, nx), jnp.float32),   # merged head outputs
        ],
        compiler_params=pltpu.CompilerParams(
            # batch axis feeds both v7x TensorCores; q axis carries the K/V
            # scratch across query tiles, so it must be sequential.
            dimension_semantics=("parallel", "arbitrary"),
            vmem_limit_bytes=_vmem_limit_bytes(),
        ),
    )(x, mask3,
      wq, bq, wk, bk, wv, bv,
      wpr, params["bpr"],
      params["ln1g"], params["ln1b"],
      wfc, params["bfc"], wp2, params["bp2"],
      params["ln2g"], params["ln2b"])


# -------- pure-JAX reference (mirrors the PyTorch module) --------
def block_reference(x, sequence_mask, params, n_head, scale=False):
    B, S, nx = x.shape
    dh = nx // n_head
    qkv = x @ params["wqkv"] + params["bqkv"][0]
    q, k, v = jnp.split(qkv, 3, axis=-1)
    sh = lambda t: t.reshape(B, S, n_head, dh).transpose(0, 2, 1, 3)
    q, k, v = sh(q), sh(k), sh(v)
    w = jnp.einsum("bhqd,bhkd->bhqk", q, k)
    if scale:
        w = w / math.sqrt(dh)
    tril = jnp.tril(jnp.ones((S, S), jnp.float32))
    bmask = tril[None, None] * sequence_mask[:, None, None, :]
    w = w * bmask + (-1e9) * (1.0 - bmask)
    p = jax.nn.softmax(w, axis=-1)
    a = jnp.einsum("bhqk,bhkd->bhqd", p, v)
    a = a.transpose(0, 2, 1, 3).reshape(B, S, nx)
    a = a @ params["wpr"] + params["bpr"][0]

    def ln(t, g, b):
        u = t.mean(-1, keepdims=True)
        s = ((t - u) ** 2).mean(-1, keepdims=True)
        return g[0] * ((t - u) / jnp.sqrt(s + 1e-5)) + b[0]

    n = ln(x + a, params["ln1g"], params["ln1b"])
    h = _gelu(n @ params["wfc"] + params["bfc"][0])
    h2 = h @ params["wp2"] + params["bp2"][0]
    return ln(n + h2, params["ln2g"], params["ln2b"])


if __name__ == "__main__":
    B, S, nx, nH = 2, 8, 32, 4          # n_ctx = S, cfg.hSize = nx, cfg.nH = nH
    key = jax.random.PRNGKey(0)
    keys = jax.random.split(key, 8)

    params = {
        "wqkv": jax.random.normal(keys[0], (nx, 3 * nx), jnp.float32) * 0.02,
        "bqkv": jnp.zeros((1, 3 * nx), jnp.float32),
        "wpr":  jax.random.normal(keys[1], (nx, nx), jnp.float32) * 0.02,
        "bpr":  jnp.zeros((1, nx), jnp.float32),
        "ln1g": jnp.ones((1, nx), jnp.float32),
        "ln1b": jnp.zeros((1, nx), jnp.float32),
        "wfc":  jax.random.normal(keys[2], (nx, 4 * nx), jnp.float32) * 0.02,
        "bfc":  jnp.zeros((1, 4 * nx), jnp.float32),
        "wp2":  jax.random.normal(keys[3], (4 * nx, nx), jnp.float32) * 0.02,
        "bp2":  jnp.zeros((1, nx), jnp.float32),
        "ln2g": jnp.ones((1, nx), jnp.float32),
        "ln2b": jnp.zeros((1, nx), jnp.float32),
    }

    x = jax.random.normal(keys[4], (B, S, nx), jnp.float32)
    # sequence mask: first batch fully valid, second batch last 3 positions masked out
    sequence_mask = jnp.stack([
        jnp.ones((S,), jnp.float32),
        jnp.concatenate([jnp.ones((S - 3,), jnp.float32), jnp.zeros((3,), jnp.float32)]),
    ])

    out = block_forward(x, sequence_mask, params, n_head=nH, scale=False)
    out = jax.block_until_ready(out)

    ref = block_reference(x, sequence_mask, params, n_head=nH, scale=False)
    assert out.shape == (B, S, nx)
    err = float(jnp.max(jnp.abs(out - ref)))
    assert jnp.allclose(out, ref, rtol=1e-4, atol=2e-4), err

    print("KERNEL_OK")
</pallas_src>

<mosaic_0001>
module attributes {stable_mosaic.version = 11 : i64} {
  func.func @kernel(%arg0: i32, %arg1: i32, %arg2: memref<1x8x32xf32, #tpu.memory_space<vmem>>, %arg3: memref<1x1x8xf32, #tpu.memory_space<vmem>>, %arg4: memref<32x32xf32, #tpu.memory_space<vmem>>, %arg5: memref<1x32xf32, #tpu.memory_space<vmem>>, %arg6: memref<32x32xf32, #tpu.memory_space<vmem>>, %arg7: memref<1x32xf32, #tpu.memory_space<vmem>>, %arg8: memref<32x32xf32, #tpu.memory_space<vmem>>, %arg9: memref<1x32xf32, #tpu.memory_space<vmem>>, %arg10: memref<32x32xf32, #tpu.memory_space<vmem>>, %arg11: memref<1x32xf32, #tpu.memory_space<vmem>>, %arg12: memref<1x32xf32, #tpu.memory_space<vmem>>, %arg13: memref<1x32xf32, #tpu.memory_space<vmem>>, %arg14: memref<32x128xf32, #tpu.memory_space<vmem>>, %arg15: memref<1x128xf32, #tpu.memory_space<vmem>>, %arg16: memref<128x32xf32, #tpu.memory_space<vmem>>, %arg17: memref<1x32xf32, #tpu.memory_space<vmem>>, %arg18: memref<1x32xf32, #tpu.memory_space<vmem>>, %arg19: memref<1x32xf32, #tpu.memory_space<vmem>>, %arg20: memref<1x8x32xf32, #tpu.memory_space<vmem>>, %arg21: memref<8x32xf32, #tpu.memory_space<vmem>>, %arg22: memref<8x32xf32, #tpu.memory_space<vmem>>, %arg23: memref<8x32xf32, #tpu.memory_space<vmem>>) attributes {dimension_semantics = [#tpu.dimension_semantics<parallel>, #tpu.dimension_semantics<arbitrary>], iteration_bounds = array<i64: 2, 1>, scalar_prefetch = 0 : i64, scratch_operands = 3 : i64, tpu.core_type = #tpu.core_type<tc>, window_params = [{transform_indices = @transform_0, window_bounds = array<i64: 1, 8, 32>}, {transform_indices = @transform_1, window_bounds = array<i64: 1, 1, 8>}, {pipeline_mode = #tpu.pipeline_mode<synchronous>, transform_indices = @transform_2, window_bounds = array<i64: 32, 32>}, {pipeline_mode = #tpu.pipeline_mode<synchronous>, transform_indices = @transform_3, window_bounds = array<i64: 1, 32>}, {pipeline_mode = #tpu.pipeline_mode<synchronous>, transform_indices = @transform_4, window_bounds = array<i64: 32, 32>}, {pipeline_mode = #tpu.pipeline_mode<synchronous>, transform_indices = @transform_5, window_bounds = array<i64: 1, 32>}, {pipeline_mode = #tpu.pipeline_mode<synchronous>, transform_indices = @transform_6, window_bounds = array<i64: 32, 32>}, {pipeline_mode = #tpu.pipeline_mode<synchronous>, transform_indices = @transform_7, window_bounds = array<i64: 1, 32>}, {pipeline_mode = #tpu.pipeline_mode<synchronous>, transform_indices = @transform_8, window_bounds = array<i64: 32, 32>}, {pipeline_mode = #tpu.pipeline_mode<synchronous>, transform_indices = @transform_9, window_bounds = array<i64: 1, 32>}, {pipeline_mode = #tpu.pipeline_mode<synchronous>, transform_indices = @transform_10, window_bounds = array<i64: 1, 32>}, {pipeline_mode = #tpu.pipeline_mode<synchronous>, transform_indices = @transform_11, window_bounds = array<i64: 1, 32>}, {pipeline_mode = #tpu.pipeline_mode<synchronous>, transform_indices = @transform_12, window_bounds = array<i64: 32, 128>}, {pipeline_mode = #tpu.pipeline_mode<synchronous>, transform_indices = @transform_13, window_bounds = array<i64: 1, 128>}, {pipeline_mode = #tpu.pipeline_mode<synchronous>, transform_indices = @transform_14, window_bounds = array<i64: 128, 32>}, {pipeline_mode = #tpu.pipeline_mode<synchronous>, transform_indices = @transform_15, window_bounds = array<i64: 1, 32>}, {pipeline_mode = #tpu.pipeline_mode<synchronous>, transform_indices = @transform_16, window_bounds = array<i64: 1, 32>}, {pipeline_mode = #tpu.pipeline_mode<synchronous>, transform_indices = @transform_17, window_bounds = array<i64: 1, 32>}, {transform_indices = @transform_18, window_bounds = array<i64: 1, 8, 32>}]} {
    %c0_i32 = arith.constant 0 : i32
    %0 = arith.cmpi eq, %arg1, %c0_i32 : i32
    %1 = arith.extui %0 : i1 to i32
    %c0_i32_0 = arith.constant 0 : i32
    %2 = arith.cmpi ne, %1, %c0_i32_0 : i32
    scf.if %2 {
      %c0_98 = arith.constant 0 : index
      %c0_99 = arith.constant 0 : index
      %c0_100 = arith.constant 0 : index
      %195 = vector.load %arg2[%c0_98, %c0_99, %c0_100] : memref<1x8x32xf32, #tpu.memory_space<vmem>>, vector<1x8x32xf32>
      %196 = vector.shape_cast %195 : vector<1x8x32xf32> to vector<8x32xf32>
      %c0_101 = arith.constant 0 : index
      %c0_102 = arith.constant 0 : index
      %197 = vector.load %arg6[%c0_101, %c0_102] : memref<32x32xf32, #tpu.memory_space<vmem>>, vector<32x32xf32>
      %cst_103 = arith.constant dense<0.000000e+00> : vector<8x32xf32>
      %198 = tpu.matmul %196, %197, %cst_103 {dimension_numbers = #tpu.dot_dimension_numbers<[1], [0], [0], [1], [0, 0, 1, 1], [], []>} : vector<8x32xf32>, vector<32x32xf32>, vector<8x32xf32> -> vector<8x32xf32>
      %c0_104 = arith.constant 0 : index
      %c0_105 = arith.constant 0 : index
      %199 = vector.load %arg7[%c0_104, %c0_105] : memref<1x32xf32, #tpu.memory_space<vmem>>, vector<1x32xf32>
      %200 = vector.broadcast %199 : vector<1x32xf32> to vector<8x32xf32>
      %201 = arith.addf %198, %200 : vector<8x32xf32>
      %c0_106 = arith.constant 0 : index
      %c0_107 = arith.constant 0 : index
      %202 = vector.load %arg21[%c0_106, %c0_107] : memref<8x32xf32, #tpu.memory_space<vmem>>, vector<8x32xf32>
      tpu.vector_store %arg21[%c0_106, %c0_107], %201 {strides = array<i32>} : memref<8x32xf32, #tpu.memory_space<vmem>>, vector<8x32xf32>,
      %c0_108 = arith.constant 0 : index
      %c0_109 = arith.constant 0 : index
      %203 = vector.load %arg8[%c0_108, %c0_109] : memref<32x32xf32, #tpu.memory_space<vmem>>, vector<32x32xf32>
      %cst_110 = arith.constant dense<0.000000e+00> : vector<8x32xf32>
      %204 = tpu.matmul %196, %203, %cst_110 {dimension_numbers = #tpu.dot_dimension_numbers<[1], [0], [0], [1], [0, 0, 1, 1], [], []>} : vector<8x32xf32>, vector<32x32xf32>, vector<8x32xf32> -> vector<8x32xf32>
      %c0_111 = arith.constant 0 : index
      %c0_112 = arith.constant 0 : index
      %205 = vector.load %arg9[%c0_111, %c0_112] : memref<1x32xf32, #tpu.memory_space<vmem>>, vector<1x32xf32>
      %206 = vector.broadcast %205 : vector<1x32xf32> to vector<8x32xf32>
      %207 = arith.addf %204, %206 : vector<8x32xf32>
      %c0_113 = arith.constant 0 : index
      %c0_114 = arith.constant 0 : index
      %208 = vector.load %arg22[%c0_113, %c0_114] : memref<8x32xf32, #tpu.memory_space<vmem>>, vector<8x32xf32>
      tpu.vector_store %arg22[%c0_113, %c0_114], %207 {strides = array<i32>} : memref<8x32xf32, #tpu.memory_space<vmem>>, vector<8x32xf32>,
    } else {
    }
    %c8_i32 = arith.constant 8 : i32
    %3 = arith.muli %arg1, %c8_i32 : i32
    %4 = tpu.assume_multiple %3, 8 : i32
    %c0 = arith.constant 0 : index
    %5 = arith.index_cast %4 : i32 to index
    %c0_1 = arith.constant 0 : index
    %6 = vector.load %arg2[%c0, %5, %c0_1] : memref<1x8x32xf32, #tpu.memory_space<vmem>>, vector<1x8x32xf32>
    %7 = vector.shape_cast %6 : vector<1x8x32xf32> to vector<8x32xf32>
    %c0_2 = arith.constant 0 : index
    %c0_3 = arith.constant 0 : index
    %8 = vector.load %arg4[%c0_2, %c0_3] : memref<32x32xf32, #tpu.memory_space<vmem>>, vector<32x32xf32>
    %cst = arith.constant dense<0.000000e+00> : vector<8x32xf32>
    %9 = tpu.matmul %7, %8, %cst {dimension_numbers = #tpu.dot_dimension_numbers<[1], [0], [0], [1], [0, 0, 1, 1], [], []>} : vector<8x32xf32>, vector<32x32xf32>, vector<8x32xf32> -> vector<8x32xf32>
    %c0_4 = arith.constant 0 : index
    %c0_5 = arith.constant 0 : index
    %10 = vector.load %arg5[%c0_4, %c0_5] : memref<1x32xf32, #tpu.memory_space<vmem>>, vector<1x32xf32>
    %11 = vector.broadcast %10 : vector<1x32xf32> to vector<8x32xf32>
    %12 = arith.addf %9, %11 : vector<8x32xf32>
    %c8_i32_6 = arith.constant 8 : i32
    %13 = arith.muli %arg1, %c8_i32_6 : i32
    %14 = tpu.iota {dimensions = array<i32: 0>} : vector<8x8xi32>
    %15 = vector.broadcast %13 : i32 to vector<8x8xi32>
    %16 = arith.addi %15, %14 : vector<8x8xi32>
    %17 = tpu.iota {dimensions = array<i32: 1>} : vector<8x8xi32>
    %18 = arith.cmpi sle, %17, %16 : vector<8x8xi32>
    %c0_7 = arith.constant 0 : index
    %c0_8 = arith.constant 0 : index
    %c0_9 = arith.constant 0 : index
    %19 = vector.load %arg3[%c0_7, %c0_8, %c0_9] : memref<1x1x8xf32, #tpu.memory_space<vmem>>, vector<1x1x8xf32>
    %20 = vector.shape_cast %19 : vector<1x1x8xf32> to vector<1x8xf32>
    %cst_10 = arith.constant 0.000000e+00 : f32
    %21 = vector.broadcast %cst_10 : f32 to vector<1x8xf32>
    %22 = arith.cmpf ogt, %20, %21 : vector<1x8xf32>
    %23 = vector.broadcast %22 : vector<1x8xi1> to vector<8x8xi1>
    %24 = arith.andi %18, %23 : vector<8x8xi1>
    %25 = vector.extract_strided_slice %12 {offsets = [0, 0], sizes = [8, 8], strides = [1, 1]} : vector<8x32xf32> to vector<8x8xf32>
    %c0_11 = arith.constant 0 : index
    %c0_12 = arith.constant 0 : index
    %26 = vector.load %arg21[%c0_11, %c0_12] : memref<8x32xf32, #tpu.memory_space<vmem>>, vector<8x8xf32>
    %c0_13 = arith.constant 0 : index
    %c0_14 = arith.constant 0 : index
    %27 = vector.load %arg22[%c0_13, %c0_14] : memref<8x32xf32, #tpu.memory_space<vmem>>, vector<8x8xf32>
    %cst_15 = arith.constant dense<0.000000e+00> : vector<8x8xf32>
    %28 = tpu.matmul %25, %26, %cst_15 {dimension_numbers = #tpu.dot_dimension_numbers<[1], [1], [0], [0], [0, 0, 1, 0], [], []>} : vector<8x8xf32>, vector<8x8xf32>, vector<8x8xf32> -> vector<8x8xf32>
    %cst_16 = arith.constant -1.000000e+09 : f32
    %29 = vector.broadcast %cst_16 : f32 to vector<8x8xf32>
    %30 = arith.select %24, %28, %29 : vector<8x8xi1>, vector<8x8xf32>
    %cst_17 = arith.constant dense<0xFF800000> : vector<8xf32>
    %31 = vector.multi_reduction <maximumf>, %30, %cst_17 [1] : vector<8x8xf32> to vector<8xf32>
    %32 = vector.shape_cast %31 : vector<8xf32> to vector<8x1xf32>
    %33 = vector.broadcast %32 : vector<8x1xf32> to vector<8x8xf32>
    %34 = arith.subf %30, %33 : vector<8x8xf32>
    %35 = math.exp %34 : vector<8x8xf32>
    %cst_18 = arith.constant dense<0.000000e+00> : vector<8xf32>
    %36 = vector.multi_reduction <add>, %35, %cst_18 [1] : vector<8x8xf32> to vector<8xf32>
    %37 = vector.shape_cast %36 : vector<8xf32> to vector<8x1xf32>
    %cst_19 = arith.constant dense<0.000000e+00> : vector<8x8xf32>
    %38 = tpu.matmul %35, %27, %cst_19 {dimension_numbers = #tpu.dot_dimension_numbers<[1], [0], [0], [1], [0, 0, 1, 1], [], []>} : vector<8x8xf32>, vector<8x8xf32>, vector<8x8xf32> -> vector<8x8xf32>
    %39 = tpu.reciprocal %37 {approx = true} : vector<8x1xf32> -> vector<8x1xf32>
    %40 = arith.mulf %37, %39 : vector<8x1xf32>
    %cst_20 = arith.constant 2.000000e+00 : f32
    %41 = vector.broadcast %cst_20 : f32 to vector<8x1xf32>
    %42 = arith.subf %41, %40 : vector<8x1xf32>
    %43 = arith.mulf %39, %42 : vector<8x1xf32>
    %44 = vector.broadcast %43 : vector<8x1xf32> to vector<8x8xf32>
    %45 = arith.mulf %38, %44 : vector<8x8xf32>
    %c0_21 = arith.constant 0 : index
    %c0_22 = arith.constant 0 : index
    %46 = vector.load %arg23[%c0_21, %c0_22] : memref<8x32xf32, #tpu.memory_space<vmem>>, vector<8x8xf32>
    tpu.vector_store %arg23[%c0_21, %c0_22], %45 {strides = array<i32>} : memref<8x32xf32, #tpu.memory_space<vmem>>, vector<8x8xf32>,
    %47 = vector.extract_strided_slice %12 {offsets = [0, 8], sizes = [8, 8], strides = [1, 1]} : vector<8x32xf32> to vector<8x8xf32>
    %c0_23 = arith.constant 0 : index
    %c8 = arith.constant 8 : index
    %48 = vector.load %arg21[%c0_23, %c8] : memref<8x32xf32, #tpu.memory_space<vmem>>, vector<8x8xf32>
    %c0_24 = arith.constant 0 : index
    %c8_25 = arith.constant 8 : index
    %49 = vector.load %arg22[%c0_24, %c8_25] : memref<8x32xf32, #tpu.memory_space<vmem>>, vector<8x8xf32>
    %cst_26 = arith.constant dense<0.000000e+00> : vector<8x8xf32>
    %50 = tpu.matmul %47, %48, %cst_26 {dimension_numbers = #tpu.dot_dimension_numbers<[1], [1], [0], [0], [0, 0, 1, 0], [], []>} : vector<8x8xf32>, vector<8x8xf32>, vector<8x8xf32> -> vector<8x8xf32>
    %cst_27 = arith.constant -1.000000e+09 : f32
    %51 = vector.broadcast %cst_27 : f32 to vector<8x8xf32>
    %52 = arith.select %24, %50, %51 : vector<8x8xi1>, vector<8x8xf32>
    %cst_28 = arith.constant dense<0xFF800000> : vector<8xf32>
    %53 = vector.multi_reduction <maximumf>, %52, %cst_28 [1] : vector<8x8xf32> to vector<8xf32>
    %54 = vector.shape_cast %53 : vector<8xf32> to vector<8x1xf32>
    %55 = vector.broadcast %54 : vector<8x1xf32> to vector<8x8xf32>
    %56 = arith.subf %52, %55 : vector<8x8xf32>
    %57 = math.exp %56 : vector<8x8xf32>
    %cst_29 = arith.constant dense<0.000000e+00> : vector<8xf32>
    %58 = vector.multi_reduction <add>, %57, %cst_29 [1] : vector<8x8xf32> to vector<8xf32>
    %59 = vector.shape_cast %58 : vector<8xf32> to vector<8x1xf32>
    %cst_30 = arith.constant dense<0.000000e+00> : vector<8x8xf32>
    %60 = tpu.matmul %57, %49, %cst_30 {dimension_numbers = #tpu.dot_dimension_numbers<[1], [0], [0], [1], [0, 0, 1, 1], [], []>} : vector<8x8xf32>, vector<8x8xf32>, vector<8x8xf32> -> vector<8x8xf32>
    %61 = tpu.reciprocal %59 {approx = true} : vector<8x1xf32> -> vector<8x1xf32>
    %62 = arith.mulf %59, %61 : vector<8x1xf32>
    %cst_31 = arith.constant 2.000000e+00 : f32
    %63 = vector.broadcast %cst_31 : f32 to vector<8x1xf32>
    %64 = arith.subf %63, %62 : vector<8x1xf32>
    %65 = arith.mulf %61, %64 : vector<8x1xf32>
    %66 = vector.broadcast %65 : vector<8x1xf32> to vector<8x8xf32>
    %67 = arith.mulf %60, %66 : vector<8x8xf32>
    %c0_32 = arith.constant 0 : index
    %c8_33 = arith.constant 8 : index
    %68 = vector.load %arg23[%c0_32, %c8_33] : memref<8x32xf32, #tpu.memory_space<vmem>>, vector<8x8xf32>
    tpu.vector_store %arg23[%c0_32, %c8_33], %67 {strides = array<i32>} : memref<8x32xf32, #tpu.memory_space<vmem>>, vector<8x8xf32>,
    %69 = vector.extract_strided_slice %12 {offsets = [0, 16], sizes = [8, 8], strides = [1, 1]} : vector<8x32xf32> to vector<8x8xf32>
    %c0_34 = arith.constant 0 : index
    %c16 = arith.constant 16 : index
    %70 = vector.load %arg21[%c0_34, %c16] : memref<8x32xf32, #tpu.memory_space<vmem>>, vector<8x8xf32>
    %c0_35 = arith.constant 0 : index
    %c16_36 = arith.constant 16 : index
    %71 = vector.load %arg22[%c0_35, %c16_36] : memref<8x32xf32, #tpu.memory_space<vmem>>, vector<8x8xf32>
    %cst_37 = arith.constant dense<0.000000e+00> : vector<8x8xf32>
    %72 = tpu.matmul %69, %70, %cst_37 {dimension_numbers = #tpu.dot_dimension_numbers<[1], [1], [0], [0], [0, 0, 1, 0], [], []>} : vector<8x8xf32>, vector<8x8xf32>, vector<8x8xf32> -> vector<8x8xf32>
    %cst_38 = arith.constant -1.000000e+09 : f32
    %73 = vector.broadcast %cst_38 : f32 to vector<8x8xf32>
    %74 = arith.select %24, %72, %73 : vector<8x8xi1>, vector<8x8xf32>
    %cst_39 = arith.constant dense<0xFF800000> : vector<8xf32>
    %75 = vector.multi_reduction <maximumf>, %74, %cst_39 [1] : vector<8x8xf32> to vector<8xf32>
    %76 = vector.shape_cast %75 : vector<8xf32> to vector<8x1xf32>
    %77 = vector.broadcast %76 : vector<8x1xf32> to vector<8x8xf32>
    %78 = arith.subf %74, %77 : vector<8x8xf32>
    %79 = math.exp %78 : vector<8x8xf32>
    %cst_40 = arith.constant dense<0.000000e+00> : vector<8xf32>
    %80 = vector.multi_reduction <add>, %79, %cst_40 [1] : vector<8x8xf32> to vector<8xf32>
    %81 = vector.shape_cast %80 : vector<8xf32> to vector<8x1xf32>
    %cst_41 = arith.constant dense<0.000000e+00> : vector<8x8xf32>
    %82 = tpu.matmul %79, %71, %cst_41 {dimension_numbers = #tpu.dot_dimension_numbers<[1], [0], [0], [1], [0, 0, 1, 1], [], []>} : vector<8x8xf32>, vector<8x8xf32>, vector<8x8xf32> -> vector<8x8xf32>
    %83 = tpu.reciprocal %81 {approx = true} : vector<8x1xf32> -> vector<8x1xf32>
    %84 = arith.mulf %81, %83 : vector<8x1xf32>
    %cst_42 = arith.constant 2.000000e+00 : f32
    %85 = vector.broadcast %cst_42 : f32 to vector<8x1xf32>
    %86 = arith.subf %85, %84 : vector<8x1xf32>
    %87 = arith.mulf %83, %86 : vector<8x1xf32>
    %88 = vector.broadcast %87 : vector<8x1xf32> to vector<8x8xf32>
    %89 = arith.mulf %82, %88 : vector<8x8xf32>
    %c0_43 = arith.constant 0 : index
    %c16_44 = arith.constant 16 : index
    %90 = vector.load %arg23[%c0_43, %c16_44] : memref<8x32xf32, #tpu.memory_space<vmem>>, vector<8x8xf32>
    tpu.vector_store %arg23[%c0_43, %c16_44], %89 {strides = array<i32>} : memref<8x32xf32, #tpu.memory_space<vmem>>, vector<8x8xf32>,
    %91 = vector.extract_strided_slice %12 {offsets = [0, 24], sizes = [8, 8], strides = [1, 1]} : vector<8x32xf32> to vector<8x8xf32>
    %c0_45 = arith.constant 0 : index
    %c24 = arith.constant 24 : index
    %92 = vector.load %arg21[%c0_45, %c24] : memref<8x32xf32, #tpu.memory_space<vmem>>, vector<8x8xf32>
    %c0_46 = arith.constant 0 : index
    %c24_47 = arith.constant 24 : index
    %93 = vector.load %arg22[%c0_46, %c24_47] : memref<8x32xf32, #tpu.memory_space<vmem>>, vector<8x8xf32>
    %cst_48 = arith.constant dense<0.000000e+00> : vector<8x8xf32>
    %94 = tpu.matmul %91, %92, %cst_48 {dimension_numbers = #tpu.dot_dimension_numbers<[1], [1], [0], [0], [0, 0, 1, 0], [], []>} : vector<8x8xf32>, vector<8x8xf32>, vector<8x8xf32> -> vector<8x8xf32>
    %cst_49 = arith.constant -1.000000e+09 : f32
    %95 = vector.broadcast %cst_49 : f32 to vector<8x8xf32>
    %96 = arith.select %24, %94, %95 : vector<8x8xi1>, vector<8x8xf32>
    %cst_50 = arith.constant dense<0xFF800000> : vector<8xf32>
    %97 = vector.multi_reduction <maximumf>, %96, %cst_50 [1] : vector<8x8xf32> to vector<8xf32>
    %98 = vector.shape_cast %97 : vector<8xf32> to vector<8x1xf32>
    %99 = vector.broadcast %98 : vector<8x1xf32> to vector<8x8xf32>
    %100 = arith.subf %96, %99 : vector<8x8xf32>
    %101 = math.exp %100 : vector<8x8xf32>
    %cst_51 = arith.constant dense<0.000000e+00> : vector<8xf32>
    %102 = vector.multi_reduction <add>, %101, %cst_51 [1] : vector<8x8xf32> to vector<8xf32>
    %103 = vector.shape_cast %102 : vector<8xf32> to vector<8x1xf32>
    %cst_52 = arith.constant dense<0.000000e+00> : vector<8x8xf32>
    %104 = tpu.matmul %101, %93, %cst_52 {dimension_numbers = #tpu.dot_dimension_numbers<[1], [0], [0], [1], [0, 0, 1, 1], [], []>} : vector<8x8xf32>, vector<8x8xf32>, vector<8x8xf32> -> vector<8x8xf32>
    %105 = tpu.reciprocal %103 {approx = true} : vector<8x1xf32> -> vector<8x1xf32>
    %106 = arith.mulf %103, %105 : vector<8x1xf32>
    %cst_53 = arith.constant 2.000000e+00 : f32
    %107 = vector.broadcast %cst_53 : f32 to vector<8x1xf32>
    %108 = arith.subf %107, %106 : vector<8x1xf32>
    %109 = arith.mulf %105, %108 : vector<8x1xf32>
    %110 = vector.broadcast %109 : vector<8x1xf32> to vector<8x8xf32>
    %111 = arith.mulf %104, %110 : vector<8x8xf32>
    %c0_54 = arith.constant 0 : index
    %c24_55 = arith.constant 24 : index
    %112 = vector.load %arg23[%c0_54, %c24_55] : memref<8x32xf32, #tpu.memory_space<vmem>>, vector<8x8xf32>
    tpu.vector_store %arg23[%c0_54, %c24_55], %111 {strides = array<i32>} : memref<8x32xf32, #tpu.memory_space<vmem>>, vector<8x8xf32>,
    %c0_56 = arith.constant 0 : index
    %c0_57 = arith.constant 0 : index
    %113 = vector.load %arg23[%c0_56, %c0_57] : memref<8x32xf32, #tpu.memory_space<vmem>>, vector<8x32xf32>
    %c0_58 = arith.constant 0 : index
    %c0_59 = arith.constant 0 : index
    %114 = vector.load %arg10[%c0_58, %c0_59] : memref<32x32xf32, #tpu.memory_space<vmem>>, vector<32x32xf32>
    %cst_60 = arith.constant dense<0.000000e+00> : vector<8x32xf32>
    %115 = tpu.matmul %113, %114, %cst_60 {dimension_numbers = #tpu.dot_dimension_numbers<[1], [0], [0], [1], [0, 0, 1, 1], [], []>} : vector<8x32xf32>, vector<32x32xf32>, vector<8x32xf32> -> vector<8x32xf32>
    %c0_61 = arith.constant 0 : index
    %c0_62 = arith.constant 0 : index
    %116 = vector.load %arg11[%c0_61, %c0_62] : memref<1x32xf32, #tpu.memory_space<vmem>>, vector<1x32xf32>
    %117 = vector.broadcast %116 : vector<1x32xf32> to vector<8x32xf32>
    %118 = arith.addf %115, %117 : vector<8x32xf32>
    %119 = arith.addf %7, %118 : vector<8x32xf32>
    %c0_63 = arith.constant 0 : index
    %c0_64 = arith.constant 0 : index
    %120 = vector.load %arg12[%c0_63, %c0_64] : memref<1x32xf32, #tpu.memory_space<vmem>>, vector<1x32xf32>
    %c0_65 = arith.constant 0 : index
    %c0_66 = arith.constant 0 : index
    %121 = vector.load %arg13[%c0_65, %c0_66] : memref<1x32xf32, #tpu.memory_space<vmem>>, vector<1x32xf32>
    %cst_67 = arith.constant dense<0.000000e+00> : vector<8xf32>
    %122 = vector.multi_reduction <add>, %119, %cst_67 [1] : vector<8x32xf32> to vector<8xf32>
    %123 = vector.shape_cast %122 : vector<8xf32> to vector<8x1xf32>
    %cst_68 = arith.constant 3.200000e+01 : f32
    %124 = vector.broadcast %cst_68 : f32 to vector<8x1xf32>
    %125 = arith.divf %123, %124 : vector<8x1xf32>
    %126 = vector.broadcast %125 : vector<8x1xf32> to vector<8x32xf32>
    %127 = arith.subf %119, %126 : vector<8x32xf32>
    %128 = arith.mulf %127, %127 : vector<8x32xf32>
    %cst_69 = arith.constant dense<0.000000e+00> : vector<8xf32>
    %129 = vector.multi_reduction <add>, %128, %cst_69 [1] : vector<8x32xf32> to vector<8xf32>
    %130 = vector.shape_cast %129 : vector<8xf32> to vector<8x1xf32>
    %cst_70 = arith.constant 3.200000e+01 : f32
    %131 = vector.broadcast %cst_70 : f32 to vector<8x1xf32>
    %132 = arith.divf %130, %131 : vector<8x1xf32>
    %133 = vector.broadcast %125 : vector<8x1xf32> to vector<8x32xf32>
    %134 = arith.subf %119, %133 : vector<8x32xf32>
    %cst_71 = arith.constant 9.99999974E-6 : f32
    %135 = vector.broadcast %cst_71 : f32 to vector<8x1xf32>
    %136 = arith.addf %132, %135 : vector<8x1xf32>
    %137 = math.rsqrt %136 : vector<8x1xf32>
    %138 = vector.broadcast %137 : vector<8x1xf32> to vector<8x32xf32>
    %139 = arith.mulf %134, %138 : vector<8x32xf32>
    %140 = vector.broadcast %120 : vector<1x32xf32> to vector<8x32xf32>
    %141 = arith.mulf %140, %139 : vector<8x32xf32>
    %142 = vector.broadcast %121 : vector<1x32xf32> to vector<8x32xf32>
    %143 = arith.addf %141, %142 : vector<8x32xf32>
    %c0_72 = arith.constant 0 : index
    %c0_73 = arith.constant 0 : index
    %144 = vector.load %arg14[%c0_72, %c0_73] : memref<32x128xf32, #tpu.memory_space<vmem>>, vector<32x128xf32>
    %cst_74 = arith.constant dense<0.000000e+00> : vector<8x128xf32>
    %145 = tpu.matmul %143, %144, %cst_74 {dimension_numbers = #tpu.dot_dimension_numbers<[1], [0], [0], [1], [0, 0, 1, 1], [], []>} : vector<8x32xf32>, vector<32x128xf32>, vector<8x128xf32> -> vector<8x128xf32>
    %c0_75 = arith.constant 0 : index
    %c0_76 = arith.constant 0 : index
    %146 = vector.load %arg15[%c0_75, %c0_76] : memref<1x128xf32, #tpu.memory_space<vmem>>, vector<1x128xf32>
    %147 = vector.broadcast %146 : vector<1x128xf32> to vector<8x128xf32>
    %148 = arith.addf %145, %147 : vector<8x128xf32>
    %cst_77 = arith.constant 5.000000e-01 : f32
    %149 = vector.broadcast %cst_77 : f32 to vector<8x128xf32>
    %150 = arith.mulf %149, %148 : vector<8x128xf32>
    %151 = arith.mulf %148, %148 : vector<8x128xf32>
    %152 = arith.mulf %148, %151 : vector<8x128xf32>
    %cst_78 = arith.constant 4.471500e-02 : f32
    %153 = vector.broadcast %cst_78 : f32 to vector<8x128xf32>
    %154 = arith.mulf %153, %152 : vector<8x128xf32>
    %155 = arith.addf %148, %154 : vector<8x128xf32>
    %cst_79 = arith.constant 0.797884583 : f32
    %156 = vector.broadcast %cst_79 : f32 to vector<8x128xf32>
    %157 = arith.mulf %156, %155 : vector<8x128xf32>
    %158 = math.tanh %157 : vector<8x128xf32>
    %cst_80 = arith.constant 1.000000e+00 : f32
    %159 = vector.broadcast %cst_80 : f32 to vector<8x128xf32>
    %160 = arith.addf %159, %158 : vector<8x128xf32>
    %161 = arith.mulf %150, %160 : vector<8x128xf32>
    %c0_81 = arith.constant 0 : index
    %c0_82 = arith.constant 0 : index
    %162 = vector.load %arg16[%c0_81, %c0_82] : memref<128x32xf32, #tpu.memory_space<vmem>>, vector<128x32xf32>
    %cst_83 = arith.constant dense<0.000000e+00> : vector<8x32xf32>
    %163 = tpu.matmul %161, %162, %cst_83 {dimension_numbers = #tpu.dot_dimension_numbers<[1], [0], [0], [1], [0, 0, 1, 1], [], []>} : vector<8x128xf32>, vector<128x32xf32>, vector<8x32xf32> -> vector<8x32xf32>
    %c0_84 = arith.constant 0 : index
    %c0_85 = arith.constant 0 : index
    %164 = vector.load %arg17[%c0_84, %c0_85] : memref<1x32xf32, #tpu.memory_space<vmem>>, vector<1x32xf32>
    %165 = vector.broadcast %164 : vector<1x32xf32> to vector<8x32xf32>
    %166 = arith.addf %163, %165 : vector<8x32xf32>
    %167 = arith.addf %143, %166 : vector<8x32xf32>
    %c0_86 = arith.constant 0 : index
    %c0_87 = arith.constant 0 : index
    %168 = vector.load %arg18[%c0_86, %c0_87] : memref<1x32xf32, #tpu.memory_space<vmem>>, vector<1x32xf32>
    %c0_88 = arith.constant 0 : index
    %c0_89 = arith.constant 0 : index
    %169 = vector.load %arg19[%c0_88, %c0_89] : memref<1x32xf32, #tpu.memory_space<vmem>>, vector<1x32xf32>
    %cst_90 = arith.constant dense<0.000000e+00> : vector<8xf32>
    %170 = vector.multi_reduction <add>, %167, %cst_90 [1] : vector<8x32xf32> to vector<8xf32>
    %171 = vector.shape_cast %170 : vector<8xf32> to vector<8x1xf32>
    %cst_91 = arith.constant 3.200000e+01 : f32
    %172 = vector.broadcast %cst_91 : f32 to vector<8x1xf32>
    %173 = arith.divf %171, %172 : vector<8x1xf32>
    %174 = vector.broadcast %173 : vector<8x1xf32> to vector<8x32xf32>
    %175 = arith.subf %167, %174 : vector<8x32xf32>
    %176 = arith.mulf %175, %175 : vector<8x32xf32>
    %cst_92 = arith.constant dense<0.000000e+00> : vector<8xf32>
    %177 = vector.multi_reduction <add>, %176, %cst_92 [1] : vector<8x32xf32> to vector<8xf32>
    %178 = vector.shape_cast %177 : vector<8xf32> to vector<8x1xf32>
    %cst_93 = arith.constant 3.200000e+01 : f32
    %179 = vector.broadcast %cst_93 : f32 to vector<8x1xf32>
    %180 = arith.divf %178, %179 : vector<8x1xf32>
    %181 = vector.broadcast %173 : vector<8x1xf32> to vector<8x32xf32>
    %182 = arith.subf %167, %181 : vector<8x32xf32>
    %cst_94 = arith.constant 9.99999974E-6 : f32
    %183 = vector.broadcast %cst_94 : f32 to vector<8x1xf32>
    %184 = arith.addf %180, %183 : vector<8x1xf32>
    %185 = math.rsqrt %184 : vector<8x1xf32>
    %186 = vector.broadcast %185 : vector<8x1xf32> to vector<8x32xf32>
    %187 = arith.mulf %182, %186 : vector<8x32xf32>
    %188 = vector.broadcast %168 : vector<1x32xf32> to vector<8x32xf32>
    %189 = arith.mulf %188, %187 : vector<8x32xf32>
    %190 = vector.broadcast %169 : vector<1x32xf32> to vector<8x32xf32>
    %191 = arith.addf %189, %190 : vector<8x32xf32>
    %c0_95 = arith.constant 0 : index
    %c0_96 = arith.constant 0 : index
    %c0_97 = arith.constant 0 : index
    %192 = vector.load %arg20[%c0_95, %c0_96, %c0_97] : memref<1x8x32xf32, #tpu.memory_space<vmem>>, vector<1x8x32xf32>
    %193 = vector.shape_cast %192 : vector<1x8x32xf32> to vector<8x32xf32>
    %194 = vector.shape_cast %191 : vector<8x32xf32> to vector<1x8x32xf32>
    tpu.vector_store %arg20[%c0_95, %c0_96, %c0_97], %194 {strides = array<i32>} : memref<1x8x32xf32, #tpu.memory_space<vmem>>, vector<1x8x32xf32>,
    return
  }
  func.func @transform_0(%arg0: i32, %arg1: i32) -> (i32, i32, i32) {
    %c0_i32 = arith.constant 0 : i32
    %c0_i32_0 = arith.constant 0 : i32
    %c0_i32_1 = arith.constant 0 : i32
    return %arg0, %c0_i32, %c0_i32_0 : i32, i32, i32
  }
  func.func @transform_1(%arg0: i32, %arg1: i32) -> (i32, i32, i32) {
    %c0_i32 = arith.constant 0 : i32
    %c0_i32_0 = arith.constant 0 : i32
    %c0_i32_1 = arith.constant 0 : i32
    return %arg0, %c0_i32, %c0_i32_0 : i32, i32, i32
  }
  func.func @transform_2(%arg0: i32, %arg1: i32) -> (i32, i32) {
    %c0_i32 = arith.constant 0 : i32
    %c0_i32_0 = arith.constant 0 : i32
    %c0_i32_1 = arith.constant 0 : i32
    return %c0_i32, %c0_i32_0 : i32, i32
  }
  func.func @transform_3(%arg0: i32, %arg1: i32) -> (i32, i32) {
    %c0_i32 = arith.constant 0 : i32
    %c0_i32_0 = arith.constant 0 : i32
    %c0_i32_1 = arith.constant 0 : i32
    return %c0_i32, %c0_i32_0 : i32, i32
  }
  func.func @transform_4(%arg0: i32, %arg1: i32) -> (i32, i32) {
    %c0_i32 = arith.constant 0 : i32
    %c0_i32_0 = arith.constant 0 : i32
    %c0_i32_1 = arith.constant 0 : i32
    return %c0_i32, %c0_i32_0 : i32, i32
  }
  func.func @transform_5(%arg0: i32, %arg1: i32) -> (i32, i32) {
    %c0_i32 = arith.constant 0 : i32
    %c0_i32_0 = arith.constant 0 : i32
    %c0_i32_1 = arith.constant 0 : i32
    return %c0_i32, %c0_i32_0 : i32, i32
  }
  func.func @transform_6(%arg0: i32, %arg1: i32) -> (i32, i32) {
    %c0_i32 = arith.constant 0 : i32
    %c0_i32_0 = arith.constant 0 : i32
    %c0_i32_1 = arith.constant 0 : i32
    return %c0_i32, %c0_i32_0 : i32, i32
  }
  func.func @transform_7(%arg0: i32, %arg1: i32) -> (i32, i32) {
    %c0_i32 = arith.constant 0 : i32
    %c0_i32_0 = arith.constant 0 : i32
    %c0_i32_1 = arith.constant 0 : i32
    return %c0_i32, %c0_i32_0 : i32, i32
  }
  func.func @transform_8(%arg0: i32, %arg1: i32) -> (i32, i32) {
    %c0_i32 = arith.constant 0 : i32
    %c0_i32_0 = arith.constant 0 : i32
    %c0_i32_1 = arith.constant 0 : i32
    return %c0_i32, %c0_i32_0 : i32, i32
  }
  func.func @transform_9(%arg0: i32, %arg1: i32) -> (i32, i32) {
    %c0_i32 = arith.constant 0 : i32
    %c0_i32_0 = arith.constant 0 : i32
    %c0_i32_1 = arith.constant 0 : i32
    return %c0_i32, %c0_i32_0 : i32, i32
  }
  func.func @transform_10(%arg0: i32, %arg1: i32) -> (i32, i32) {
    %c0_i32 = arith.constant 0 : i32
    %c0_i32_0 = arith.constant 0 : i32
    %c0_i32_1 = arith.constant 0 : i32
    return %c0_i32, %c0_i32_0 : i32, i32
  }
  func.func @transform_11(%arg0: i32, %arg1: i32) -> (i32, i32) {
    %c0_i32 = arith.constant 0 : i32
    %c0_i32_0 = arith.constant 0 : i32
    %c0_i32_1 = arith.constant 0 : i32
    return %c0_i32, %c0_i32_0 : i32, i32
  }
  func.func @transform_12(%arg0: i32, %arg1: i32) -> (i32, i32) {
    %c0_i32 = arith.constant 0 : i32
    %c0_i32_0 = arith.constant 0 : i32
    %c0_i32_1 = arith.constant 0 : i32
    return %c0_i32, %c0_i32_0 : i32, i32
  }
  func.func @transform_13(%arg0: i32, %arg1: i32) -> (i32, i32) {
    %c0_i32 = arith.constant 0 : i32
    %c0_i32_0 = arith.constant 0 : i32
    %c0_i32_1 = arith.constant 0 : i32
    return %c0_i32, %c0_i32_0 : i32, i32
  }
  func.func @transform_14(%arg0: i32, %arg1: i32) -> (i32, i32) {
    %c0_i32 = arith.constant 0 : i32
    %c0_i32_0 = arith.constant 0 : i32
    %c0_i32_1 = arith.constant 0 : i32
    return %c0_i32, %c0_i32_0 : i32, i32
  }
  func.func @transform_15(%arg0: i32, %arg1: i32) -> (i32, i32) {
    %c0_i32 = arith.constant 0 : i32
    %c0_i32_0 = arith.constant 0 : i32
    %c0_i32_1 = arith.constant 0 : i32
    return %c0_i32, %c0_i32_0 : i32, i32
  }
  func.func @transform_16(%arg0: i32, %arg1: i32) -> (i32, i32) {
    %c0_i32 = arith.constant 0 : i32
    %c0_i32_0 = arith.constant 0 : i32
    %c0_i32_1 = arith.constant 0 : i32
    return %c0_i32, %c0_i32_0 : i32, i32
  }
  func.func @transform_17(%arg0: i32, %arg1: i32) -> (i32, i32) {
    %c0_i32 = arith.constant 0 : i32
    %c0_i32_0 = arith.constant 0 : i32
    %c0_i32_1 = arith.constant 0 : i32
    return %c0_i32, %c0_i32_0 : i32, i32
  }
  func.func @transform_18(%arg0: i32, %arg1: i32) -> (i32, i32, i32) {
    %c0_i32 = arith.constant 0 : i32
    %c0_i32_0 = arith.constant 0 : i32
    return %arg0, %arg1, %c0_i32 : i32, i32, i32
  }
}

</mosaic_0001>

<llo_original>
// kernel: tpu_custom_call.1
$region0: #{tpu_custom_call.1}
  #allocation0 [shape = 'u32[]', space=smem, size = 0x4, offset = 0x4, fixed_abs, tag = 'smem constant byte address 0x4 - core index']
  #allocation1 [shape = 'u32[144,128]{1,0:T(1,128)}', space=vmem, size = 0x12000, scoped, tag = 'internal scratch']
  #allocation2 [shape = 'f32[8,32]{1,0:T(8,128)}', space=vmem, size = 0x1000, scoped, tag = 'scratch operand']
  #allocation3 [shape = 'f32[8,32]{1,0:T(8,128)}', space=vmem, size = 0x1000, scoped, tag = 'scratch operand']
  #allocation4 [shape = 'f32[8,32]{1,0:T(8,128)}', space=vmem, size = 0x1000, scoped, tag = 'scratch operand']
  %s0 = inlined_call_operand.hbm [shape: f32[2,8,32], index: 0, kind: input, shape index: {}]
  %s1 = inlined_call_operand.hbm [shape: f32[2,1,8], index: 1, kind: input, shape index: {}]
  %s2 = inlined_call_operand.vmem [shape: f32[32,32], index: 2, kind: input, shape index: {}]
  %s3 = inlined_call_operand.vmem [shape: f32[1,32], index: 3, kind: input, shape index: {}]
  %s4 = inlined_call_operand.vmem [shape: f32[32,32], index: 4, kind: input, shape index: {}]
  %s5 = inlined_call_operand.vmem [shape: f32[1,32], index: 5, kind: input, shape index: {}]
  %s6 = inlined_call_operand.vmem [shape: f32[32,32], index: 6, kind: input, shape index: {}]
  %s7 = inlined_call_operand.vmem [shape: f32[1,32], index: 7, kind: input, shape index: {}]
  %s8 = inlined_call_operand.vmem [shape: f32[32,32], index: 8, kind: input, shape index: {}]
  %s9 = inlined_call_operand.vmem [shape: f32[1,32], index: 9, kind: input, shape index: {}]
  %s10 = inlined_call_operand.vmem [shape: f32[1,32], index: 10, kind: input, shape index: {}]
  %s11 = inlined_call_operand.vmem [shape: f32[1,32], index: 11, kind: input, shape index: {}]
  %s12 = inlined_call_operand.vmem [shape: f32[32,128], index: 12, kind: input, shape index: {}]
  %s13 = inlined_call_operand.vmem [shape: f32[1,128], index: 13, kind: input, shape index: {}]
  %s14 = inlined_call_operand.vmem [shape: f32[128,32], index: 14, kind: input, shape index: {}]
  %s15 = inlined_call_operand.vmem [shape: f32[1,32], index: 15, kind: input, shape index: {}]
  %s16 = inlined_call_operand.vmem [shape: f32[1,32], index: 16, kind: input, shape index: {}]
  %s17 = inlined_call_operand.vmem [shape: f32[1,32], index: 17, kind: input, shape index: {}]
  %s18 = inlined_call_operand.hbm [shape: f32[2,8,32], index: 18, kind: output, shape index: {}]
  %s19 = sld [smem:[#allocation0]]
  $region117: #{tpu_custom_call.1} parent=0
    _
  %s21 = ssub.s32 1, %s19
  %s22 = scalar_select 0, %s21, %s19
  $region1: #{tpu_custom_call.1} parent=0
    #allocation5 [shape = 'u8[8192]{0}', space=vmem, size = 0x2000, scoped, tag = 'input window, operand 0']
    #allocation6 [shape = 's32[2]{0}', space=sflag, size = 0x8, scoped, tag = 'scoped memory for tpu_custom_call.1']
    #allocation7 [shape = 's32[2]{0}', space=sflag, size = 0x8, scoped, tag = 'scoped memory for tpu_custom_call.1']
    #allocation8 [shape = 'u8[1024]{0}', space=vmem, size = 0x400, scoped, tag = 'input window, operand 1']
    #allocation9 [shape = 's32[2]{0}', space=sflag, size = 0x8, scoped, tag = 'scoped memory for tpu_custom_call.1']
    #allocation10 [shape = 'u8[8192]{0}', space=vmem, size = 0x2000, scoped, tag = 'output window, operand 0']
    %23 = vsyncpa [#allocation6], 0
    %s24 = scalar_lea.sflag [#allocation6], 1
    %25 = vsyncpa %s24, 0
    %26 = vsyncpa [#allocation9], 0
    %s27 = scalar_lea.sflag [#allocation9], 1
    %28 = vsyncpa %s27, 0
    %29 = vsyncpa [#allocation7], 0
    %s30 = scalar_lea.sflag [#allocation7], 1
    %31 = vsyncpa %s30, 0
    loop: start=0, step=1, limit=4
    $region2: #{tpu_custom_call.1} parent=1 // loop_pre_header
      _
    $region3: #{tpu_custom_call.1} parent=1 // loop_header
      %s33 = sphi 0, %s37
      %p34 = scmp.ge.s32.totalorder %s33, 4
      %s40 = sphi 0, %s52
      %s41 = sphi 0, %s48
      %s42 = sphi 0, %s40
      %s43 = sphi 0, %s41
      %s44 = sphi 0, %s42
      %s45 = sphi 0, %s43
      %s55 = sphi 0, %s57
      %s58 = sphi 0, %s55
      %s59 = sphi 0, %s58
      %s75 = sphi 0, %s59
      %s81 = sphi 0, %s83
      %s84 = sphi 0, %s81
      %s85 = sphi 0, %s84
      %s101 = sphi 0, %s85
      %s105 = sphi 0, %s105
      %s107 = sphi 0, %s105
      %s108 = sphi 0, %s107
      %s122 = sphi 0, %s108
      %s126 = sphi 0, %s126
      %s128 = sphi 0, %s126
      %s129 = sphi 0, %s128
      %s143 = sphi 0, %s129
      %s147 = sphi 0, %s147
      %s149 = sphi 0, %s147
      %s150 = sphi 0, %s149
      %s164 = sphi 0, %s150
      %s168 = sphi 0, %s168
      %s170 = sphi 0, %s168
      %s171 = sphi 0, %s170
      %s185 = sphi 0, %s171
      %s189 = sphi 0, %s189
      %s191 = sphi 0, %s189
      %s192 = sphi 0, %s191
      %s206 = sphi 0, %s192
      %s210 = sphi 0, %s210
      %s212 = sphi 0, %s210
      %s213 = sphi 0, %s212
      %s227 = sphi 0, %s213
      %s231 = sphi 0, %s231
      %s233 = sphi 0, %s231
      %s234 = sphi 0, %s233
      %s248 = sphi 0, %s234
      %s252 = sphi 0, %s252
      %s254 = sphi 0, %s252
      %s255 = sphi 0, %s254
      %s269 = sphi 0, %s255
      %s273 = sphi 0, %s273
      %s275 = sphi 0, %s273
      %s276 = sphi 0, %s275
      %s290 = sphi 0, %s276
      %s294 = sphi 0, %s294
      %s296 = sphi 0, %s294
      %s297 = sphi 0, %s296
      %s311 = sphi 0, %s297
      %s315 = sphi 0, %s315
      %s317 = sphi 0, %s315
      %s318 = sphi 0, %s317
      %s332 = sphi 0, %s318
      %s336 = sphi 0, %s336
      %s338 = sphi 0, %s336
      %s339 = sphi 0, %s338
      %s353 = sphi 0, %s339
      %s357 = sphi 0, %s357
      %s359 = sphi 0, %s357
      %s360 = sphi 0, %s359
      %s374 = sphi 0, %s360
      %s378 = sphi 0, %s378
      %s380 = sphi 0, %s378
      %s381 = sphi 0, %s380
      %s395 = sphi 0, %s381
      %s399 = sphi 0, %s399
      %s401 = sphi 0, %s399
      %s402 = sphi 0, %s401
      %s416 = sphi 0, %s402
      %s420 = sphi 0, %s420
      %s422 = sphi 0, %s420
      %s423 = sphi 0, %s422
      %s437 = sphi 0, %s423
      %s445 = sphi 0, %s447
      %s448 = sphi 0, %s445
      %s449 = sphi 0, %s448
      %s465 = sphi 0, %s449
    $region4: #{tpu_custom_call.1} parent=1 // loop_header_branch
      %36 = sbr.rel (%p34) target = $region8
    $region5: #{tpu_custom_call.1} parent=1 // loop_body
      %s38 = ssub.s32 %s33, 1
      %s39 = ssub.s32 %s33, 2
      %s46 = sadd.s32 1, %s41
      %p47 = scmp.ge.s32.totalorder %s46, 1
      %s48 = scalar_select %p47, 0, %s46
      %s49 = sadd.s32 1, %s40
      %s50 = scalar_select %p47, %s49, %s40
      %p51 = scmp.ge.s32.totalorder %s50, 2
      %s52 = scalar_select %p51, 0, %s50
      %s53 = ssub.s32 %s40, %s52
      %p54 = scmp.eq.s32.totalorder %s53, 0
      %s56 = sadd.s32 %s55, 1
      %s57 = scalar_select %p54, %s55, %s56
      %p60 = pneg %p54
      %p61 = scmp.eq.s32.totalorder %s33, 1
      %p62 = por %p60, %p61
      %p63 = scmp.ne.s32.totalorder %s55, %s58
      %p64 = scmp.eq.s32.totalorder %s33, 0
      %p65 = por %p63, %p64
      %p66 = scmp.ne.s32.totalorder %s55, %s58
      %p67 = scmp.eq.s32.totalorder %s38, 1
      %p68 = por %p66, %p67
      %p69 = scmp.ne.s32.totalorder %s58, %s59
      %p70 = scmp.eq.s32.totalorder %s38, 0
      %p71 = por %p69, %p70
      %p72 = scmp.ne.s32.totalorder %s58, %s59
      %p73 = scmp.eq.s32.totalorder %s39, 1
      %p74 = por %p72, %p73
      %p76 = scmp.ne.s32.totalorder %s59, %s75
      %p77 = scmp.eq.s32.totalorder %s39, 0
      %p78 = por %p76, %p77
      %s79 = ssub.s32 %s40, %s52
      %p80 = scmp.eq.s32.totalorder %s79, 0
      %s82 = sadd.s32 %s81, 1
      %s83 = scalar_select %p80, %s81, %s82
      %p86 = pneg %p80
      %p87 = scmp.eq.s32.totalorder %s33, 1
      %p88 = por %p86, %p87
      %p89 = scmp.ne.s32.totalorder %s81, %s84
      %p90 = scmp.eq.s32.totalorder %s33, 0
      %p91 = por %p89, %p90
      %p92 = scmp.ne.s32.totalorder %s81, %s84
      %p93 = scmp.eq.s32.totalorder %s38, 1
      %p94 = por %p92, %p93
      %p95 = scmp.ne.s32.totalorder %s84, %s85
      %p96 = scmp.eq.s32.totalorder %s38, 0
      %p97 = por %p95, %p96
      %p98 = scmp.ne.s32.totalorder %s84, %s85
      %p99 = scmp.eq.s32.totalorder %s39, 1
      %p100 = por %p98, %p99
      %p102 = scmp.ne.s32.totalorder %s85, %s101
      %p103 = scmp.eq.s32.totalorder %s39, 0
      %p104 = por %p102, %p103
      %s106 = sadd.s32 %s105, 1
      %p109 = scmp.eq.s32.totalorder %s33, 1
      %p110 = scmp.ne.s32.totalorder %s105, %s107
      %p111 = scmp.eq.s32.totalorder %s33, 0
      %p112 = por %p110, %p111
      %p113 = scmp.ne.s32.totalorder %s105, %s107
      %p114 = scmp.eq.s32.totalorder %s38, 1
      %p115 = por %p113, %p114
      %p116 = scmp.ne.s32.totalorder %s107, %s108
      %p117 = scmp.eq.s32.totalorder %s38, 0
      %p118 = por %p116, %p117
      %p119 = scmp.ne.s32.totalorder %s107, %s108
      %p120 = scmp.eq.s32.totalorder %s39, 1
      %p121 = por %p119, %p120
      %p123 = scmp.ne.s32.totalorder %s108, %s122
      %p124 = scmp.eq.s32.totalorder %s39, 0
      %p125 = por %p123, %p124
      %s127 = sadd.s32 %s126, 1
      %p130 = scmp.eq.s32.totalorder %s33, 1
      %p131 = scmp.ne.s32.totalorder %s126, %s128
      %p132 = scmp.eq.s32.totalorder %s33, 0
      %p133 = por %p131, %p132
      %p134 = scmp.ne.s32.totalorder %s126, %s128
      %p135 = scmp.eq.s32.totalorder %s38, 1
      %p136 = por %p134, %p135
      %p137 = scmp.ne.s32.totalorder %s128, %s129
      %p138 = scmp.eq.s32.totalorder %s38, 0
      %p139 = por %p137, %p138
      %p140 = scmp.ne.s32.totalorder %s128, %s129
      %p141 = scmp.eq.s32.totalorder %s39, 1
      %p142 = por %p140, %p141
      %p144 = scmp.ne.s32.totalorder %s129, %s143
      %p145 = scmp.eq.s32.totalorder %s39, 0
      %p146 = por %p144, %p145
      %s148 = sadd.s32 %s147, 1
      %p151 = scmp.eq.s32.totalorder %s33, 1
      %p152 = scmp.ne.s32.totalorder %s147, %s149
      %p153 = scmp.eq.s32.totalorder %s33, 0
      %p154 = por %p152, %p153
      %p155 = scmp.ne.s32.totalorder %s147, %s149
      %p156 = scmp.eq.s32.totalorder %s38, 1
      %p157 = por %p155, %p156
      %p158 = scmp.ne.s32.totalorder %s149, %s150
      %p159 = scmp.eq.s32.totalorder %s38, 0
      %p160 = por %p158, %p159
      %p161 = scmp.ne.s32.totalorder %s149, %s150
      %p162 = scmp.eq.s32.totalorder %s39, 1
      %p163 = por %p161, %p162
      %p165 = scmp.ne.s32.totalorder %s150, %s164
      %p166 = scmp.eq.s32.totalorder %s39, 0
      %p167 = por %p165, %p166
      %s169 = sadd.s32 %s168, 1
      %p172 = scmp.eq.s32.totalorder %s33, 1
      %p173 = scmp.ne.s32.totalorder %s168, %s170
      %p174 = scmp.eq.s32.totalorder %s33, 0
      %p175 = por %p173, %p174
      %p176 = scmp.ne.s32.totalorder %s168, %s170
      %p177 = scmp.eq.s32.totalorder %s38, 1
      %p178 = por %p176, %p177
      %p179 = scmp.ne.s32.totalorder %s170, %s171
      %p180 = scmp.eq.s32.totalorder %s38, 0
      %p181 = por %p179, %p180
      %p182 = scmp.ne.s32.totalorder %s170, %s171
      %p183 = scmp.eq.s32.totalorder %s39, 1
      %p184 = por %p182, %p183
      %p186 = scmp.ne.s32.totalorder %s171, %s185
      %p187 = scmp.eq.s32.totalorder %s39, 0
      %p188 = por %p186, %p187
      %s190 = sadd.s32 %s189, 1
      %p193 = scmp.eq.s32.totalorder %s33, 1
      %p194 = scmp.ne.s32.totalorder %s189, %s191
      %p195 = scmp.eq.s32.totalorder %s33, 0
      %p196 = por %p194, %p195
      %p197 = scmp.ne.s32.totalorder %s189, %s191
      %p198 = scmp.eq.s32.totalorder %s38, 1
      %p199 = por %p197, %p198
      %p200 = scmp.ne.s32.totalorder %s191, %s192
      %p201 = scmp.eq.s32.totalorder %s38, 0
      %p202 = por %p200, %p201
      %p203 = scmp.ne.s32.totalorder %s191, %s192
      %p204 = scmp.eq.s32.totalorder %s39, 1
      %p205 = por %p203, %p204
      %p207 = scmp.ne.s32.totalorder %s192, %s206
      %p208 = scmp.eq.s32.totalorder %s39, 0
      %p209 = por %p207, %p208
      %s211 = sadd.s32 %s210, 1
      %p214 = scmp.eq.s32.totalorder %s33, 1
      %p215 = scmp.ne.s32.totalorder %s210, %s212
      %p216 = scmp.eq.s32.totalorder %s33, 0
      %p217 = por %p215, %p216
      %p218 = scmp.ne.s32.totalorder %s210, %s212
      %p219 = scmp.eq.s32.totalorder %s38, 1
      %p220 = por %p218, %p219
      %p221 = scmp.ne.s32.totalorder %s212, %s213
      %p222 = scmp.eq.s32.totalorder %s38, 0
      %p223 = por %p221, %p222
      %p224 = scmp.ne.s32.totalorder %s212, %s213
      %p225 = scmp.eq.s32.totalorder %s39, 1
      %p226 = por %p224, %p225
      %p228 = scmp.ne.s32.totalorder %s213, %s227
      %p229 = scmp.eq.s32.totalorder %s39, 0
      %p230 = por %p228, %p229
      %s232 = sadd.s32 %s231, 1
      %p235 = scmp.eq.s32.totalorder %s33, 1
      %p236 = scmp.ne.s32.totalorder %s231, %s233
      %p237 = scmp.eq.s32.totalorder %s33, 0
      %p238 = por %p236, %p237
      %p239 = scmp.ne.s32.totalorder %s231, %s233
      %p240 = scmp.eq.s32.totalorder %s38, 1
      %p241 = por %p239, %p240
      %p242 = scmp.ne.s32.totalorder %s233, %s234
      %p243 = scmp.eq.s32.totalorder %s38, 0
      %p244 = por %p242, %p243
      %p245 = scmp.ne.s32.totalorder %s233, %s234
      %p246 = scmp.eq.s32.totalorder %s39, 1
      %p247 = por %p245, %p246
      %p249 = scmp.ne.s32.totalorder %s234, %s248
      %p250 = scmp.eq.s32.totalorder %s39, 0
      %p251 = por %p249, %p250
      %s253 = sadd.s32 %s252, 1
      %p256 = scmp.eq.s32.totalorder %s33, 1
      %p257 = scmp.ne.s32.totalorder %s252, %s254
      %p258 = scmp.eq.s32.totalorder %s33, 0
      %p259 = por %p257, %p258
      %p260 = scmp.ne.s32.totalorder %s252, %s254
      %p261 = scmp.eq.s32.totalorder %s38, 1
      %p262 = por %p260, %p261
      %p263 = scmp.ne.s32.totalorder %s254, %s255
      %p264 = scmp.eq.s32.totalorder %s38, 0
      %p265 = por %p263, %p264
      %p266 = scmp.ne.s32.totalorder %s254, %s255
      %p267 = scmp.eq.s32.totalorder %s39, 1
      %p268 = por %p266, %p267
      %p270 = scmp.ne.s32.totalorder %s255, %s269
      %p271 = scmp.eq.s32.totalorder %s39, 0
      %p272 = por %p270, %p271
      %s274 = sadd.s32 %s273, 1
      %p277 = scmp.eq.s32.totalorder %s33, 1
      %p278 = scmp.ne.s32.totalorder %s273, %s275
      %p279 = scmp.eq.s32.totalorder %s33, 0
      %p280 = por %p278, %p279
      %p281 = scmp.ne.s32.totalorder %s273, %s275
      %p282 = scmp.eq.s32.totalorder %s38, 1
      %p283 = por %p281, %p282
      %p284 = scmp.ne.s32.totalorder %s275, %s276
      %p285 = scmp.eq.s32.totalorder %s38, 0
      %p286 = por %p284, %p285
      %p287 = scmp.ne.s32.totalorder %s275, %s276
      %p288 = scmp.eq.s32.totalorder %s39, 1
      %p289 = por %p287, %p288
      %p291 = scmp.ne.s32.totalorder %s276, %s290
      %p292 = scmp.eq.s32.totalorder %s39, 0
      %p293 = por %p291, %p292
      %s295 = sadd.s32 %s294, 1
      %p298 = scmp.eq.s32.totalorder %s33, 1
      %p299 = scmp.ne.s32.totalorder %s294, %s296
      %p300 = scmp.eq.s32.totalorder %s33, 0
      %p301 = por %p299, %p300
      %p302 = scmp.ne.s32.totalorder %s294, %s296
      %p303 = scmp.eq.s32.totalorder %s38, 1
      %p304 = por %p302, %p303
      %p305 = scmp.ne.s32.totalorder %s296, %s297
      %p306 = scmp.eq.s32.totalorder %s38, 0
      %p307 = por %p305, %p306
      %p308 = scmp.ne.s32.totalorder %s296, %s297
      %p309 = scmp.eq.s32.totalorder %s39, 1
      %p310 = por %p308, %p309
      %p312 = scmp.ne.s32.totalorder %s297, %s311
      %p313 = scmp.eq.s32.totalorder %s39, 0
      %p314 = por %p312, %p313
      %s316 = sadd.s32 %s315, 1
      %p319 = scmp.eq.s32.totalorder %s33, 1
      %p320 = scmp.ne.s32.totalorder %s315, %s317
      %p321 = scmp.eq.s32.totalorder %s33, 0
      %p322 = por %p320, %p321
      %p323 = scmp.ne.s32.totalorder %s315, %s317
      %p324 = scmp.eq.s32.totalorder %s38, 1
      %p325 = por %p323, %p324
      %p326 = scmp.ne.s32.totalorder %s317, %s318
      %p327 = scmp.eq.s32.totalorder %s38, 0
      %p328 = por %p326, %p327
      %p329 = scmp.ne.s32.totalorder %s317, %s318
      %p330 = scmp.eq.s32.totalorder %s39, 1
      %p331 = por %p329, %p330
      %p333 = scmp.ne.s32.totalorder %s318, %s332
      %p334 = scmp.eq.s32.totalorder %s39, 0
      %p335 = por %p333, %p334
      %s337 = sadd.s32 %s336, 1
      %p340 = scmp.eq.s32.totalorder %s33, 1
      %p341 = scmp.ne.s32.totalorder %s336, %s338
      %p342 = scmp.eq.s32.totalorder %s33, 0
      %p343 = por %p341, %p342
      %p344 = scmp.ne.s32.totalorder %s336, %s338
      %p345 = scmp.eq.s32.totalorder %s38, 1
      %p346 = por %p344, %p345
      %p347 = scmp.ne.s32.totalorder %s338, %s339
      %p348 = scmp.eq.s32.totalorder %s38, 0
      %p349 = por %p347, %p348
      %p350 = scmp.ne.s32.totalorder %s338, %s339
      %p351 = scmp.eq.s32.totalorder %s39, 1
      %p352 = por %p350, %p351
      %p354 = scmp.ne.s32.totalorder %s339, %s353
      %p355 = scmp.eq.s32.totalorder %s39, 0
      %p356 = por %p354, %p355
      %s358 = sadd.s32 %s357, 1
      %p361 = scmp.eq.s32.totalorder %s33, 1
      %p362 = scmp.ne.s32.totalorder %s357, %s359
      %p363 = scmp.eq.s32.totalorder %s33, 0
      %p364 = por %p362, %p363
      %p365 = scmp.ne.s32.totalorder %s357, %s359
      %p366 = scmp.eq.s32.totalorder %s38, 1
      %p367 = por %p365, %p366
      %p368 = scmp.ne.s32.totalorder %s359, %s360
      %p369 = scmp.eq.s32.totalorder %s38, 0
      %p370 = por %p368, %p369
      %p371 = scmp.ne.s32.totalorder %s359, %s360
      %p372 = scmp.eq.s32.totalorder %s39, 1
      %p373 = por %p371, %p372
      %p375 = scmp.ne.s32.totalorder %s360, %s374
      %p376 = scmp.eq.s32.totalorder %s39, 0
      %p377 = por %p375, %p376
      %s379 = sadd.s32 %s378, 1
      %p382 = scmp.eq.s32.totalorder %s33, 1
      %p383 = scmp.ne.s32.totalorder %s378, %s380
      %p384 = scmp.eq.s32.totalorder %s33, 0
      %p385 = por %p383, %p384
      %p386 = scmp.ne.s32.totalorder %s378, %s380
      %p387 = scmp.eq.s32.totalorder %s38, 1
      %p388 = por %p386, %p387
      %p389 = scmp.ne.s32.totalorder %s380, %s381
      %p390 = scmp.eq.s32.totalorder %s38, 0
      %p391 = por %p389, %p390
      %p392 = scmp.ne.s32.totalorder %s380, %s381
      %p393 = scmp.eq.s32.totalorder %s39, 1
      %p394 = por %p392, %p393
      %p396 = scmp.ne.s32.totalorder %s381, %s395
      %p397 = scmp.eq.s32.totalorder %s39, 0
      %p398 = por %p396, %p397
      %s400 = sadd.s32 %s399, 1
      %p403 = scmp.eq.s32.totalorder %s33, 1
      %p404 = scmp.ne.s32.totalorder %s399, %s401
      %p405 = scmp.eq.s32.totalorder %s33, 0
      %p406 = por %p404, %p405
      %p407 = scmp.ne.s32.totalorder %s399, %s401
      %p408 = scmp.eq.s32.totalorder %s38, 1
      %p409 = por %p407, %p408
      %p410 = scmp.ne.s32.totalorder %s401, %s402
      %p411 = scmp.eq.s32.totalorder %s38, 0
      %p412 = por %p410, %p411
      %p413 = scmp.ne.s32.totalorder %s401, %s402
      %p414 = scmp.eq.s32.totalorder %s39, 1
      %p415 = por %p413, %p414
      %p417 = scmp.ne.s32.totalorder %s402, %s416
      %p418 = scmp.eq.s32.totalorder %s39, 0
      %p419 = por %p417, %p418
      %s421 = sadd.s32 %s420, 1
      %p424 = scmp.eq.s32.totalorder %s33, 1
      %p425 = scmp.ne.s32.totalorder %s420, %s422
      %p426 = scmp.eq.s32.totalorder %s33, 0
      %p427 = por %p425, %p426
      %p428 = scmp.ne.s32.totalorder %s420, %s422
      %p429 = scmp.eq.s32.totalorder %s38, 1
      %p430 = por %p428, %p429
      %p431 = scmp.ne.s32.totalorder %s422, %s423
      %p432 = scmp.eq.s32.totalorder %s38, 0
      %p433 = por %p431, %p432
      %p434 = scmp.ne.s32.totalorder %s422, %s423
      %p435 = scmp.eq.s32.totalorder %s39, 1
      %p436 = por %p434, %p435
      %p438 = scmp.ne.s32.totalorder %s423, %s437
      %p439 = scmp.eq.s32.totalorder %s39, 0
      %p440 = por %p438, %p439
      %s441 = ssub.s32 %s40, %s52
      %s442 = ssub.s32 %s41, %s48
      %s443 = sor.u32 %s441, %s442
      %p444 = scmp.eq.s32.totalorder %s443, 0
      %s446 = sadd.s32 %s445, 1
      %s447 = scalar_select %p444, %s445, %s446
      %p450 = pneg %p444
      %p451 = scmp.eq.s32.totalorder %s33, 1
      %p452 = por %p450, %p451
      %p453 = scmp.ne.s32.totalorder %s445, %s448
      %p454 = scmp.eq.s32.totalorder %s33, 0
      %p455 = por %p453, %p454
      %p456 = scmp.ne.s32.totalorder %s445, %s448
      %p457 = scmp.eq.s32.totalorder %s38, 1
      %p458 = por %p456, %p457
      %p459 = scmp.ne.s32.totalorder %s448, %s449
      %p460 = scmp.eq.s32.totalorder %s38, 0
      %p461 = por %p459, %p460
      %p462 = scmp.ne.s32.totalorder %s448, %s449
      %p463 = scmp.eq.s32.totalorder %s39, 1
      %p464 = por %p462, %p463
      %p466 = scmp.ne.s32.totalorder %s449, %s465
      %p467 = scmp.eq.s32.totalorder %s39, 0
      %p468 = por %p466, %p467
      %p469 = scmp.le.s32.totalorder 1, %s33
      %p470 = scmp.lt.s32.totalorder %s33, 3
      %p471 = pnand %p469, %p470
      %p472 = pneg %p471
      // Predicated region
      $region9: #{tpu_custom_call.1} parent=5 // pred_check
        _
      $region10: #{tpu_custom_call.1} parent=5 // pred_check_branch
        %474 = sbr.rel (%p471) target = $region12
      $region11: #{tpu_custom_call.1} parent=5 // pred_region
        %s475 = ssub.s32 %s33, 1
        // Predicated region
        $region13: #{tpu_custom_call.1} parent=11 // pred_check
          %p476 = pneg %p118
        $region14: #{tpu_custom_call.1} parent=11 // pred_check_branch
          %478 = sbr.rel (%p476) target = $region16
        $region15: #{tpu_custom_call.1} parent=11 // pred_region
          _
        $region16: #{tpu_custom_call.1} parent=11 // pred_fallthru
          _
        // Predicated region
        $region17: #{tpu_custom_call.1} parent=11 // pred_check
          %p479 = pneg %p139
        $region18: #{tpu_custom_call.1} parent=11 // pred_check_branch
          %481 = sbr.rel (%p479) target = $region20
        $region19: #{tpu_custom_call.1} parent=11 // pred_region
          _
        $region20: #{tpu_custom_call.1} parent=11 // pred_fallthru
          _
        // Predicated region
        $region21: #{tpu_custom_call.1} parent=11 // pred_check
          %p482 = pneg %p160
        $region22: #{tpu_custom_call.1} parent=11 // pred_check_branch
          %484 = sbr.rel (%p482) target = $region24
        $region23: #{tpu_custom_call.1} parent=11 // pred_region
          _
        $region24: #{tpu_custom_call.1} parent=11 // pred_fallthru
          _
        // Predicated region
        $region25: #{tpu_custom_call.1} parent=11 // pred_check
          %p485 = pneg %p181
        $region26: #{tpu_custom_call.1} parent=11 // pred_check_branch
          %487 = sbr.rel (%p485) target = $region28
        $region27: #{tpu_custom_call.1} parent=11 // pred_region
          _
        $region28: #{tpu_custom_call.1} parent=11 // pred_fallthru
          _
        // Predicated region
        $region29: #{tpu_custom_call.1} parent=11 // pred_check
          %p488 = pneg %p202
        $region30: #{tpu_custom_call.1} parent=11 // pred_check_branch
          %490 = sbr.rel (%p488) target = $region32
        $region31: #{tpu_custom_call.1} parent=11 // pred_region
          _
        $region32: #{tpu_custom_call.1} parent=11 // pred_fallthru
          _
        // Predicated region
        $region33: #{tpu_custom_call.1} parent=11 // pred_check
          %p491 = pneg %p223
        $region34: #{tpu_custom_call.1} parent=11 // pred_check_branch
          %493 = sbr.rel (%p491) target = $region36
        $region35: #{tpu_custom_call.1} parent=11 // pred_region
          _
        $region36: #{tpu_custom_call.1} parent=11 // pred_fallthru
          _
        // Predicated region
        $region37: #{tpu_custom_call.1} parent=11 // pred_check
          %p494 = pneg %p244
        $region38: #{tpu_custom_call.1} parent=11 // pred_check_branch
          %496 = sbr.rel (%p494) target = $region40
        $region39: #{tpu_custom_call.1} parent=11 // pred_region
          _
        $region40: #{tpu_custom_call.1} parent=11 // pred_fallthru
          _
        // Predicated region
        $region41: #{tpu_custom_call.1} parent=11 // pred_check
          %p497 = pneg %p265
        $region42: #{tpu_custom_call.1} parent=11 // pred_check_branch
          %499 = sbr.rel (%p497) target = $region44
        $region43: #{tpu_custom_call.1} parent=11 // pred_region
          _
        $region44: #{tpu_custom_call.1} parent=11 // pred_fallthru
          _
        // Predicated region
        $region45: #{tpu_custom_call.1} parent=11 // pred_check
          %p500 = pneg %p286
        $region46: #{tpu_custom_call.1} parent=11 // pred_check_branch
          %502 = sbr.rel (%p500) target = $region48
        $region47: #{tpu_custom_call.1} parent=11 // pred_region
          _
        $region48: #{tpu_custom_call.1} parent=11 // pred_fallthru
          _
        // Predicated region
        $region49: #{tpu_custom_call.1} parent=11 // pred_check
          %p503 = pneg %p307
        $region50: #{tpu_custom_call.1} parent=11 // pred_check_branch
          %505 = sbr.rel (%p503) target = $region52
        $region51: #{tpu_custom_call.1} parent=11 // pred_region
          _
        $region52: #{tpu_custom_call.1} parent=11 // pred_fallthru
          _
        // Predicated region
        $region53: #{tpu_custom_call.1} parent=11 // pred_check
          %p506 = pneg %p328
        $region54: #{tpu_custom_call.1} parent=11 // pred_check_branch
          %508 = sbr.rel (%p506) target = $region56
        $region55: #{tpu_custom_call.1} parent=11 // pred_region
          _
        $region56: #{tpu_custom_call.1} parent=11 // pred_fallthru
          _
        // Predicated region
        $region57: #{tpu_custom_call.1} parent=11 // pred_check
          %p509 = pneg %p349
        $region58: #{tpu_custom_call.1} parent=11 // pred_check_branch
          %511 = sbr.rel (%p509) target = $region60
        $region59: #{tpu_custom_call.1} parent=11 // pred_region
          _
        $region60: #{tpu_custom_call.1} parent=11 // pred_fallthru
          _
        // Predicated region
        $region61: #{tpu_custom_call.1} parent=11 // pred_check
          %p512 = pneg %p370
        $region62: #{tpu_custom_call.1} parent=11 // pred_check_branch
          %514 = sbr.rel (%p512) target = $region64
        $region63: #{tpu_custom_call.1} parent=11 // pred_region
          _
        $region64: #{tpu_custom_call.1} parent=11 // pred_fallthru
          _
        // Predicated region
        $region65: #{tpu_custom_call.1} parent=11 // pred_check
          %p515 = pneg %p391
        $region66: #{tpu_custom_call.1} parent=11 // pred_check_branch
          %517 = sbr.rel (%p515) target = $region68
        $region67: #{tpu_custom_call.1} parent=11 // pred_region
          _
        $region68: #{tpu_custom_call.1} parent=11 // pred_fallthru
          _
        // Predicated region
        $region69: #{tpu_custom_call.1} parent=11 // pred_check
          %p518 = pneg %p412
        $region70: #{tpu_custom_call.1} parent=11 // pred_check_branch
          %520 = sbr.rel (%p518) target = $region72
        $region71: #{tpu_custom_call.1} parent=11 // pred_region
          _
        $region72: #{tpu_custom_call.1} parent=11 // pred_fallthru
          _
        // Predicated region
        $region73: #{tpu_custom_call.1} parent=11 // pred_check
          %p521 = pneg %p433
        $region74: #{tpu_custom_call.1} parent=11 // pred_check_branch
          %523 = sbr.rel (%p521) target = $region76
        $region75: #{tpu_custom_call.1} parent=11 // pred_region
          _
        $region76: #{tpu_custom_call.1} parent=11 // pred_fallthru
          _
      $region12: #{tpu_custom_call.1} parent=5 // pred_fallthru
        _
      %p524 = scmp.lt.s32.totalorder %s33, 2
      // Predicated region
      $region77: #{tpu_custom_call.1} parent=5 // pred_check
        %p525 = pneg %p524
      $region78: #{tpu_custom_call.1} parent=5 // pred_check_branch
        %527 = sbr.rel (%p525) target = $region80
      $region79: #{tpu_custom_call.1} parent=5 // pred_region
        // Predicated region
        $region81: #{tpu_custom_call.1} parent=79 // pred_check
          %p528 = pneg %p65
        $region82: #{tpu_custom_call.1} parent=79 // pred_check_branch
          %530 = sbr.rel (%p528) target = $region84
        $region83: #{tpu_custom_call.1} parent=79 // pred_region
          %s531 = sand.u32 %s55, 1
          %s532 = scalar_lea.sflag [#allocation6], %s531
          %s533 = sand.u32 %s55, 1
          %s534 = smul.addr %s533, 8
          %s535 = scalar_lea.vmem [#allocation5], %s534
          %s537 = ssub.s32 128, 128
          %538 = vsyncadd %s532, %s537
          %s539 = smul.addr %s40, 128
          %s540 = scalar_lea.hbm %s0, %s539
          %s542 = sshll.u32 %s535, 4
          %s543 = int_to_ptr.vmem [resolvable:$true] %s542
          %545 = dma.hbm_to_vmem [thread:$0]  %s540, 128, %s543, %s532
        $region84: #{tpu_custom_call.1} parent=79 // pred_fallthru
          _
        // Predicated region
        $region85: #{tpu_custom_call.1} parent=79 // pred_check
          %p546 = pneg %p91
        $region86: #{tpu_custom_call.1} parent=79 // pred_check_branch
          %548 = sbr.rel (%p546) target = $region88
        $region87: #{tpu_custom_call.1} parent=79 // pred_region
          %s549 = sand.u32 %s81, 1
          %s550 = scalar_lea.sflag [#allocation9], %s549
          %s551 = sand.u32 %s81, 1
          %s552 = scalar_lea.vmem [#allocation8], %s551
          %s554 = ssub.s32 16, 16
          %555 = vsyncadd %s550, %s554
          %s556 = smul.addr %s40, 16
          %s557 = scalar_lea.hbm %s1, %s556
          %s559 = sshll.u32 %s552, 4
          %s560 = int_to_ptr.vmem [resolvable:$true] %s559
          %562 = dma.hbm_to_vmem [thread:$0]  %s557, 16, %s560, %s550
        $region88: #{tpu_custom_call.1} parent=79 // pred_fallthru
          _
      $region80: #{tpu_custom_call.1} parent=5 // pred_fallthru
        _
      %p563 = scmp.le.s32.totalorder 1, %s33
      %p564 = scmp.lt.s32.totalorder %s33, 3
      %p565 = pnand %p563, %p564
      %p566 = pneg %p565
      // Predicated region
      $region89: #{tpu_custom_call.1} parent=5 // pred_check
        _
      $region90: #{tpu_custom_call.1} parent=5 // pred_check_branch
        %568 = sbr.rel (%p565) target = $region92
      $region91: #{tpu_custom_call.1} parent=5 // pred_region
        %s569 = ssub.s32 %s33, 1
        %s570 = sand.u32 %s58, 1
        %s571 = scalar_lea.sflag [#allocation6], %s570
        %s572 = sand.u32 %s58, 1
        %s573 = smul.addr %s572, 8
        %s574 = scalar_lea.vmem [#allocation5], %s573
        // Predicated region
        $region93: #{tpu_custom_call.1} parent=91 // pred_check
          %p575 = pneg %p71
        $region94: #{tpu_custom_call.1} parent=91 // pred_check_branch
          %577 = sbr.rel (%p575) target = $region96
        $region95: #{tpu_custom_call.1} parent=91 // pred_region
          %578 = dma.done %s571, 128
        $region96: #{tpu_custom_call.1} parent=91 // pred_fallthru
          _
        %s579 = sand.u32 %s84, 1
        %s580 = scalar_lea.sflag [#allocation9], %s579
        %s581 = sand.u32 %s84, 1
        %s582 = scalar_lea.vmem [#allocation8], %s581
        // Predicated region
        $region97: #{tpu_custom_call.1} parent=91 // pred_check
          %p583 = pneg %p97
        $region98: #{tpu_custom_call.1} parent=91 // pred_check_branch
          %585 = sbr.rel (%p583) target = $region100
        $region99: #{tpu_custom_call.1} parent=91 // pred_region
          %586 = dma.done %s580, 16
        $region100: #{tpu_custom_call.1} parent=91 // pred_fallthru
          _
        %s587 = sand.u32 %s58, 1
        %s588 = scalar_lea.sflag [#allocation6], %s587
        %s589 = sand.u32 %s58, 1
        %s590 = smul.addr %s589, 8
        %s591 = scalar_lea.vmem [#allocation5], %s590
        %p592 = pneg %p71
        %p593 = pneg %p68
        %s594 = sand.u32 %s84, 1
        %s595 = scalar_lea.sflag [#allocation9], %s594
        %s596 = sand.u32 %s84, 1
        %s597 = scalar_lea.vmem [#allocation8], %s596
        %p598 = pneg %p97
        %p599 = pneg %p94
        %p600 = pneg %p118
        %p601 = pneg %p115
        %p602 = pneg %p139
        %p603 = pneg %p136
        %p604 = pneg %p160
        %p605 = pneg %p157
        %p606 = pneg %p181
        %p607 = pneg %p178
        %p608 = pneg %p202
        %p609 = pneg %p199
        %p610 = pneg %p223
        %p611 = pneg %p220
        %p612 = pneg %p244
        %p613 = pneg %p241
        %p614 = pneg %p265
        %p615 = pneg %p262
        %p616 = pneg %p286
        %p617 = pneg %p283
        %p618 = pneg %p307
        %p619 = pneg %p304
        %p620 = pneg %p328
        %p621 = pneg %p325
        %p622 = pneg %p349
        %p623 = pneg %p346
        %p624 = pneg %p370
        %p625 = pneg %p367
        %p626 = pneg %p391
        %p627 = pneg %p388
        %p628 = pneg %p412
        %p629 = pneg %p409
        %p630 = pneg %p433
        %p631 = pneg %p430
        %p632 = pneg %p461
        %p633 = pneg %p458
        %s634 = sand.u32 %s448, 1
        %s635 = scalar_lea.sflag [#allocation7], %s634
        %s636 = sand.u32 %s448, 1
        %s637 = smul.addr %s636, 8
        %s638 = scalar_lea.vmem [#allocation10], %s637
        %p639 = scmp.eq.s32.totalorder %s43, 0
        // Predicated region
        $region101: #{tpu_custom_call.1} parent=91 // pred_check
          %p640 = pneg %p639
        $region102: #{tpu_custom_call.1} parent=91 // pred_check_branch
          %642 = sbr.rel (%p640) target = $region104
        $region103: #{tpu_custom_call.1} parent=91 // pred_region
          %v643 = vld [vmem:[%s574] sm:$0xff]
          %v644 = vld [vmem:[%s4] sm:$0xff]
          %v645 = vld [vmem:[%s4 + $0x8] sm:$0xff]
          %v646 = vld [vmem:[%s4 + $0x10] sm:$0xff]
          %v647 = vld [vmem:[%s4 + $0x18] sm:$0xff]
          %v648 = vld [vmem:[%s5] sm:$0x1]
          %v650 = vlaneseq
          %v651 = vshrl.u32 %v650, 7
          %v652 = vsub.s32 0, %v651
          %v653 = vrot.slane %v648, %v652
          %vm655 = vcmask 261120
          %v657 = vsel %vm655, %v643, 0
          %659 = vmatprep.subr.mxu0 0.0
          %660 = vmatpush1.msra.mxu0 0.0
          %661 = vmatprep.subr.mxu0 0.0
          %662 = vmatpush1.msra.mxu0 0.0
          %663 = vmatprep.subr.mxu0 0.0
          %664 = vmatpush1.msra.mxu0 0.0
          %665 = vmatprep.subr.mxu0 0.0
          %666 = vmatpush1.msra.mxu0 0.0
          %667 = vmatprep.subr.mxu0 0.0
          %668 = vmatpush1.msra.mxu0 0.0
          %669 = vmatprep.subr.mxu0 0.0
          %670 = vmatpush1.msra.mxu0 0.0
          %671 = vmatprep.subr.mxu0 0.0
          %672 = vmatpush1.msra.mxu0 0.0
          %673 = vmatprep.subr.mxu0 0.0
          %674 = vmatpush1.msra.mxu0 0.0
          %675 = vmatprep.subr.mxu0 0.0
          %676 = vmatpush1.msra.mxu0 0.0
          %677 = vmatprep.subr.mxu0 0.0
          %678 = vmatpush1.msra.mxu0 0.0
          %679 = vmatprep.subr.mxu0 0.0
          %680 = vmatpush1.msra.mxu0 0.0
          %681 = vmatprep.subr.mxu0 0.0
          %682 = vmatpush1.msra.mxu0 0.0
          %683 = vmatprep.subr.mxu0 0.0
          %684 = vmatpush1.msra.mxu0 %v647
          %685 = vmatprep.subr.mxu0 0.0
          %686 = vmatpush1.msra.mxu0 %v646
          %687 = vmatprep.subr.mxu0 0.0
          %688 = vmatpush1.msra.mxu0 %v645
          %689 = vmatprep.subr.mxu0 0.0
          %690 = vmatpush1.msra.mxu0 %v644
          %691 = vmatprep.subr.mxu0 0.0
          %692 = vmatpush2.msra.mxu0 0.0
          %693 = vmatprep.subr.mxu0 0.0
          %694 = vmatpush2.msra.mxu0 0.0
          %695 = vmatprep.subr.mxu0 0.0
          %696 = vmatpush2.msra.mxu0 0.0
          %697 = vmatprep.subr.mxu0 0.0
          %698 = vmatpush2.msra.mxu0 0.0
          %699 = vmatprep.subr.mxu0 0.0
          %700 = vmatpush2.msra.mxu0 0.0
          %701 = vmatprep.subr.mxu0 0.0
          %702 = vmatpush2.msra.mxu0 0.0
          %703 = vmatprep.subr.mxu0 0.0
          %704 = vmatpush2.msra.mxu0 0.0
          %705 = vmatprep.subr.mxu0 0.0
          %706 = vmatpush2.msra.mxu0 0.0
          %707 = vmatprep.subr.mxu0 0.0
          %708 = vmatpush2.msra.mxu0 0.0
          %709 = vmatprep.subr.mxu0 0.0
          %710 = vmatpush2.msra.mxu0 0.0
          %711 = vmatprep.subr.mxu0 0.0
          %712 = vmatpush2.msra.mxu0 0.0
          %713 = vmatprep.subr.mxu0 0.0
          %714 = vmatpush2.msra.mxu0 0.0
          %715 = vmatprep.subr.mxu0 0.0
          %716 = vmatpush2.msra.mxu0 0.0
          %717 = vmatprep.subr.mxu0 0.0
          %718 = vmatpush2.msra.mxu0 0.0
          %719 = vmatprep.subr.mxu0 0.0
          %720 = vmatpush2.msra.mxu0 0.0
          %721 = vmatprep.subr.mxu0 0.0
          %722 = vmatpush2.msra.mxu0 0.0
          %723 = vmatprep.mubr.f32.mxu0 0.0
          %724 = vmatmul.mubr.f32.gmra.mxu0 %v657
          %v725 = vpop.f32.mrf.mxu0
          %v726 = vadd.f32 %v653, %v725
          %v727 = vpop.f32.mrf.mxu0
          %728 = vdwg.mxu0
          %729 = vst.msk [vmem:[#allocation2] sm:$0xff] %vm655, %v726
          %v730 = vld [vmem:[%s6] sm:$0xff]
          %v731 = vld [vmem:[%s6 + $0x8] sm:$0xff]
          %v732 = vld [vmem:[%s6 + $0x10] sm:$0xff]
          %v733 = vld [vmem:[%s6 + $0x18] sm:$0xff]
          %v734 = vld [vmem:[%s7] sm:$0x1]
          %v736 = vlaneseq
          %v737 = vshrl.u32 %v736, 7
          %v738 = vsub.s32 0, %v737
          %v739 = vrot.slane %v734, %v738
          %741 = vmatprep.subr.mxu0 0.0
          %742 = vmatpush1.msra.mxu0 0.0
          %743 = vmatprep.subr.mxu0 0.0
          %744 = vmatpush1.msra.mxu0 0.0
          %745 = vmatprep.subr.mxu0 0.0
          %746 = vmatpush1.msra.mxu0 0.0
          %747 = vmatprep.subr.mxu0 0.0
          %748 = vmatpush1.msra.mxu0 0.0
          %749 = vmatprep.subr.mxu0 0.0
          %750 = vmatpush1.msra.mxu0 0.0
          %751 = vmatprep.subr.mxu0 0.0
          %752 = vmatpush1.msra.mxu0 0.0
          %753 = vmatprep.subr.mxu0 0.0
          %754 = vmatpush1.msra.mxu0 0.0
          %755 = vmatprep.subr.mxu0 0.0
          %756 = vmatpush1.msra.mxu0 0.0
          %757 = vmatprep.subr.mxu0 0.0
          %758 = vmatpush1.msra.mxu0 0.0
          %759 = vmatprep.subr.mxu0 0.0
          %760 = vmatpush1.msra.mxu0 0.0
          %761 = vmatprep.subr.mxu0 0.0
          %762 = vmatpush1.msra.mxu0 0.0
          %763 = vmatprep.subr.mxu0 0.0
          %764 = vmatpush1.msra.mxu0 0.0
          %765 = vmatprep.subr.mxu0 0.0
          %766 = vmatpush1.msra.mxu0 %v733
          %767 = vmatprep.subr.mxu0 0.0
          %768 = vmatpush1.msra.mxu0 %v732
          %769 = vmatprep.subr.mxu0 0.0
          %770 = vmatpush1.msra.mxu0 %v731
          %771 = vmatprep.subr.mxu0 0.0
          %772 = vmatpush1.msra.mxu0 %v730
          %773 = vmatprep.subr.mxu0 0.0
          %774 = vmatpush2.msra.mxu0 0.0
          %775 = vmatprep.subr.mxu0 0.0
          %776 = vmatpush2.msra.mxu0 0.0
          %777 = vmatprep.subr.mxu0 0.0
          %778 = vmatpush2.msra.mxu0 0.0
          %779 = vmatprep.subr.mxu0 0.0
          %780 = vmatpush2.msra.mxu0 0.0
          %781 = vmatprep.subr.mxu0 0.0
          %782 = vmatpush2.msra.mxu0 0.0
          %783 = vmatprep.subr.mxu0 0.0
          %784 = vmatpush2.msra.mxu0 0.0
          %785 = vmatprep.subr.mxu0 0.0
          %786 = vmatpush2.msra.mxu0 0.0
          %787 = vmatprep.subr.mxu0 0.0
          %788 = vmatpush2.msra.mxu0 0.0
          %789 = vmatprep.subr.mxu0 0.0
          %790 = vmatpush2.msra.mxu0 0.0
          %791 = vmatprep.subr.mxu0 0.0
          %792 = vmatpush2.msra.mxu0 0.0
          %793 = vmatprep.subr.mxu0 0.0
          %794 = vmatpush2.msra.mxu0 0.0
          %795 = vmatprep.subr.mxu0 0.0
          %796 = vmatpush2.msra.mxu0 0.0
          %797 = vmatprep.subr.mxu0 0.0
          %798 = vmatpush2.msra.mxu0 0.0
          %799 = vmatprep.subr.mxu0 0.0
          %800 = vmatpush2.msra.mxu0 0.0
          %801 = vmatprep.subr.mxu0 0.0
          %802 = vmatpush2.msra.mxu0 0.0
          %803 = vmatprep.subr.mxu0 0.0
          %804 = vmatpush2.msra.mxu0 0.0
          %805 = vmatprep.mubr.f32.mxu0 0.0
          %806 = vmatmul.mubr.f32.gmra.mxu0 %v657
          %v807 = vpop.f32.mrf.mxu0
          %v808 = vadd.f32 %v739, %v807
          %v809 = vpop.f32.mrf.mxu0
          %810 = vdwg.mxu0
          %811 = vst.msk [vmem:[#allocation3] sm:$0xff] %vm655, %v808
        $region104: #{tpu_custom_call.1} parent=91 // pred_fallthru
          _
        %s812 = smul.u32 %s43, 8
        %s813 = scalar_lea.vmem %s574, %s812 [#allocation5]
        %v814 = vld [vmem:[%s813] sm:$0xff]
        %v815 = vld [vmem:[%s2] sm:$0xff]
        %v816 = vld [vmem:[%s2 + $0x8] sm:$0xff]
        %v817 = vld [vmem:[%s2 + $0x10] sm:$0xff]
        %v818 = vld [vmem:[%s2 + $0x18] sm:$0xff]
        %v819 = vld [vmem:[%s3] sm:$0x1]
        %v821 = vlaneseq
        %v822 = vshrl.u32 %v821, 7
        %v823 = vsub.s32 0, %v822
        %v824 = vrot.slane %v819, %v823
        %vm826 = vcmask 261120
        %v828 = vsel %vm826, %v814, 0
        %830 = vmatprep.subr.mxu0 0.0
        %831 = vmatpush1.msra.mxu0 0.0
        %832 = vmatprep.subr.mxu0 0.0
        %833 = vmatpush1.msra.mxu0 0.0
        %834 = vmatprep.subr.mxu0 0.0
        %835 = vmatpush1.msra.mxu0 0.0
        %836 = vmatprep.subr.mxu0 0.0
        %837 = vmatpush1.msra.mxu0 0.0
        %838 = vmatprep.subr.mxu0 0.0
        %839 = vmatpush1.msra.mxu0 0.0
        %840 = vmatprep.subr.mxu0 0.0
        %841 = vmatpush1.msra.mxu0 0.0
        %842 = vmatprep.subr.mxu0 0.0
        %843 = vmatpush1.msra.mxu0 0.0
        %844 = vmatprep.subr.mxu0 0.0
        %845 = vmatpush1.msra.mxu0 0.0
        %846 = vmatprep.subr.mxu0 0.0
        %847 = vmatpush1.msra.mxu0 0.0
        %848 = vmatprep.subr.mxu0 0.0
        %849 = vmatpush1.msra.mxu0 0.0
        %850 = vmatprep.subr.mxu0 0.0
        %851 = vmatpush1.msra.mxu0 0.0
        %852 = vmatprep.subr.mxu0 0.0
        %853 = vmatpush1.msra.mxu0 0.0
        %854 = vmatprep.subr.mxu0 0.0
        %855 = vmatpush1.msra.mxu0 %v818
        %856 = vmatprep.subr.mxu0 0.0
        %857 = vmatpush1.msra.mxu0 %v817
        %858 = vmatprep.subr.mxu0 0.0
        %859 = vmatpush1.msra.mxu0 %v816
        %860 = vmatprep.subr.mxu0 0.0
        %861 = vmatpush1.msra.mxu0 %v815
        %862 = vmatprep.subr.mxu0 0.0
        %863 = vmatpush2.msra.mxu0 0.0
        %864 = vmatprep.subr.mxu0 0.0
        %865 = vmatpush2.msra.mxu0 0.0
        %866 = vmatprep.subr.mxu0 0.0
        %867 = vmatpush2.msra.mxu0 0.0
        %868 = vmatprep.subr.mxu0 0.0
        %869 = vmatpush2.msra.mxu0 0.0
        %870 = vmatprep.subr.mxu0 0.0
        %871 = vmatpush2.msra.mxu0 0.0
        %872 = vmatprep.subr.mxu0 0.0
        %873 = vmatpush2.msra.mxu0 0.0
        %874 = vmatprep.subr.mxu0 0.0
        %875 = vmatpush2.msra.mxu0 0.0
        %876 = vmatprep.subr.mxu0 0.0
        %877 = vmatpush2.msra.mxu0 0.0
        %878 = vmatprep.subr.mxu0 0.0
        %879 = vmatpush2.msra.mxu0 0.0
        %880 = vmatprep.subr.mxu0 0.0
        %881 = vmatpush2.msra.mxu0 0.0
        %882 = vmatprep.subr.mxu0 0.0
        %883 = vmatpush2.msra.mxu0 0.0
        %884 = vmatprep.subr.mxu0 0.0
        %885 = vmatpush2.msra.mxu0 0.0
        %886 = vmatprep.subr.mxu0 0.0
        %887 = vmatpush2.msra.mxu0 0.0
        %888 = vmatprep.subr.mxu0 0.0
        %889 = vmatpush2.msra.mxu0 0.0
        %890 = vmatprep.subr.mxu0 0.0
        %891 = vmatpush2.msra.mxu0 0.0
        %892 = vmatprep.subr.mxu0 0.0
        %893 = vmatpush2.msra.mxu0 0.0
        %894 = vmatprep.mubr.f32.mxu0 0.0
        %895 = vmatmul.mubr.f32.gmra.mxu0 %v828
        %v896 = vpop.f32.mrf.mxu0
        %v897 = vadd.f32 %v824, %v896
        %v898 = vpop.f32.mrf.mxu0
        %899 = vdwg.mxu0
        %v900 = vlaneseq
        %v901 = vshrl.u32 %v900, 7
        %v902 = vstv %s812
        %v903 = vadd.s32 %v902, %v901
        %v904 = vlaneseq
        %v905 = vand.u32 %v904, 127
        %vm906 = vcmp.le.s32.totalorder %v905, %v903
        %v907 = vld [vmem:[%s582] sm:$0x1]
        %vm908 = vcmp.gt.f32.partialorder %v907, 0.0
        %v909 = vsel %vm908, 1, 0
        %v910 = vlaneseq
        %v911 = vshrl.u32 %v910, 7
        %v912 = vsub.s32 0, %v911
        %v913 = vrot.slane %v909, %v912
        %vm914 = vcmp.eq.s32.totalorder %v913, 1
        %vm915 = vmand %vm906, %vm914
        %v916 = vld [vmem:[#allocation2] sm:$0xff]
        %v917 = vld [vmem:[#allocation3] sm:$0xff]
        %vm918 = vcmask 64512
        %v920 = vsel %vm918, %v897, 0
        %v923 = vsel %vm918, %v916, 0
        %925 = vmatprep.subr.mxu0 0.0
        %926 = vmatpush1.xpose.msra.mxu0 0.0
        %927 = vmatprep.subr.mxu0 0.0
        %928 = vmatpush1.xpose.msra.mxu0 0.0
        %929 = vmatprep.subr.mxu0 0.0
        %930 = vmatpush1.xpose.msra.mxu0 0.0
        %931 = vmatprep.subr.mxu0 0.0
        %932 = vmatpush1.xpose.msra.mxu0 0.0
        %933 = vmatprep.subr.mxu0 0.0
        %934 = vmatpush1.xpose.msra.mxu0 0.0
        %935 = vmatprep.subr.mxu0 0.0
        %936 = vmatpush1.xpose.msra.mxu0 0.0
        %937 = vmatprep.subr.mxu0 0.0
        %938 = vmatpush1.xpose.msra.mxu0 0.0
        %939 = vmatprep.subr.mxu0 0.0
        %940 = vmatpush1.xpose.msra.mxu0 0.0
        %941 = vmatprep.subr.mxu0 0.0
        %942 = vmatpush1.xpose.msra.mxu0 0.0
        %943 = vmatprep.subr.mxu0 0.0
        %944 = vmatpush1.xpose.msra.mxu0 0.0
        %945 = vmatprep.subr.mxu0 0.0
        %946 = vmatpush1.xpose.msra.mxu0 0.0
        %947 = vmatprep.subr.mxu0 0.0
        %948 = vmatpush1.xpose.msra.mxu0 0.0
        %949 = vmatprep.subr.mxu0 0.0
        %950 = vmatpush1.xpose.msra.mxu0 0.0
        %951 = vmatprep.subr.mxu0 0.0
        %952 = vmatpush1.xpose.msra.mxu0 0.0
        %953 = vmatprep.subr.mxu0 0.0
        %954 = vmatpush1.xpose.msra.mxu0 0.0
        %955 = vmatprep.subr.mxu0 0.0
        %956 = vmatpush1.xpose.msra.mxu0 %v923
        %957 = vmatprep.subr.mxu0 0.0
        %958 = vmatpush2.xpose.msra.mxu0 0.0
        %959 = vmatprep.subr.mxu0 0.0
        %960 = vmatpush2.xpose.msra.mxu0 0.0
        %961 = vmatprep.subr.mxu0 0.0
        %962 = vmatpush2.xpose.msra.mxu0 0.0
        %963 = vmatprep.subr.mxu0 0.0
        %964 = vmatpush2.xpose.msra.mxu0 0.0
        %965 = vmatprep.subr.mxu0 0.0
        %966 = vmatpush2.xpose.msra.mxu0 0.0
        %967 = vmatprep.subr.mxu0 0.0
        %968 = vmatpush2.xpose.msra.mxu0 0.0
        %969 = vmatprep.subr.mxu0 0.0
        %970 = vmatpush2.xpose.msra.mxu0 0.0
        %971 = vmatprep.subr.mxu0 0.0
        %972 = vmatpush2.xpose.msra.mxu0 0.0
        %973 = vmatprep.subr.mxu0 0.0
        %974 = vmatpush2.xpose.msra.mxu0 0.0
        %975 = vmatprep.subr.mxu0 0.0
        %976 = vmatpush2.xpose.msra.mxu0 0.0
        %977 = vmatprep.subr.mxu0 0.0
        %978 = vmatpush2.xpose.msra.mxu0 0.0
        %979 = vmatprep.subr.mxu0 0.0
        %980 = vmatpush2.xpose.msra.mxu0 0.0
        %981 = vmatprep.subr.mxu0 0.0
        %982 = vmatpush2.xpose.msra.mxu0 0.0
        %983 = vmatprep.subr.mxu0 0.0
        %984 = vmatpush2.xpose.msra.mxu0 0.0
        %985 = vmatprep.subr.mxu0 0.0
        %986 = vmatpush2.xpose.msra.mxu0 0.0
        %987 = vmatprep.subr.mxu0 0.0
        %988 = vmatpush2.xpose.msra.mxu0 0.0
        %989 = vmatprep.mubr.f32.mxu0 0.0
        %990 = vmatmul.mubr.f32.gmra.mxu0 %v920
        %v991 = vpop.f32.mrf.mxu0
        %v992 = vadd.f32 0.0, %v991
        %v993 = vpop.f32.mrf.mxu0
        %994 = vdwg.mxu0
        %v995 = vsel %vm915, %v992, -1e+09
        %v996 = vsel %vm918, %v995, -inf
        %997 = vmax.xlane.f32.xlu0 %v996
        %v998 = vpop.xlane.xlu0 %997
        %v999 = vsub.f32 %v995, %v998
        %v1000 = vmul.f32 %v999, 1.442695
        %v1001 = vpow.pop %v1000
        %v1002 = vsel %vm918, %v1001, 0.0
        %1003 = vadd.xlane.f32.xlu0 %v1002
        %v1004 = vpop.xlane.xlu0 %1003
        %v1006 = vsel %vm918, %v1001, 0
        %1008 = vmatprep.subr.mxu0 0.0
        %1009 = vmatpush1.msra.mxu0 0.0
        %1010 = vmatprep.subr.mxu0 0.0
        %1011 = vmatpush1.msra.mxu0 0.0
        %1012 = vmatprep.subr.mxu0 0.0
        %1013 = vmatpush1.msra.mxu0 0.0
        %1014 = vmatprep.subr.mxu0 0.0
        %1015 = vmatpush1.msra.mxu0 0.0
        %1016 = vmatprep.subr.mxu0 0.0
        %1017 = vmatpush1.msra.mxu0 0.0
        %1018 = vmatprep.subr.mxu0 0.0
        %1019 = vmatpush1.msra.mxu0 0.0
        %1020 = vmatprep.subr.mxu0 0.0
        %1021 = vmatpush1.msra.mxu0 0.0
        %1022 = vmatprep.subr.mxu0 0.0
        %1023 = vmatpush1.msra.mxu0 0.0
        %1024 = vmatprep.subr.mxu0 0.0
        %1025 = vmatpush1.msra.mxu0 0.0
        %1026 = vmatprep.subr.mxu0 0.0
        %1027 = vmatpush1.msra.mxu0 0.0
        %1028 = vmatprep.subr.mxu0 0.0
        %1029 = vmatpush1.msra.mxu0 0.0
        %1030 = vmatprep.subr.mxu0 0.0
        %1031 = vmatpush1.msra.mxu0 0.0
        %1032 = vmatprep.subr.mxu0 0.0
        %1033 = vmatpush1.msra.mxu0 0.0
        %1034 = vmatprep.subr.mxu0 0.0
        %1035 = vmatpush1.msra.mxu0 0.0
        %1036 = vmatprep.subr.mxu0 0.0
        %1037 = vmatpush1.msra.mxu0 0.0
        %1038 = vmatprep.subr.mxu0 0.0
        %1039 = vmatpush1.msra.mxu0 %v917
        %1040 = vmatprep.subr.mxu0 0.0
        %1041 = vmatpush2.msra.mxu0 0.0
        %1042 = vmatprep.subr.mxu0 0.0
        %1043 = vmatpush2.msra.mxu0 0.0
        %1044 = vmatprep.subr.mxu0 0.0
        %1045 = vmatpush2.msra.mxu0 0.0
        %1046 = vmatprep.subr.mxu0 0.0
        %1047 = vmatpush2.msra.mxu0 0.0
        %1048 = vmatprep.subr.mxu0 0.0
        %1049 = vmatpush2.msra.mxu0 0.0
        %1050 = vmatprep.subr.mxu0 0.0
        %1051 = vmatpush2.msra.mxu0 0.0
        %1052 = vmatprep.subr.mxu0 0.0
        %1053 = vmatpush2.msra.mxu0 0.0
        %1054 = vmatprep.subr.mxu0 0.0
        %1055 = vmatpush2.msra.mxu0 0.0
        %1056 = vmatprep.subr.mxu0 0.0
        %1057 = vmatpush2.msra.mxu0 0.0
        %1058 = vmatprep.subr.mxu0 0.0
        %1059 = vmatpush2.msra.mxu0 0.0
        %1060 = vmatprep.subr.mxu0 0.0
        %1061 = vmatpush2.msra.mxu0 0.0
        %1062 = vmatprep.subr.mxu0 0.0
        %1063 = vmatpush2.msra.mxu0 0.0
        %1064 = vmatprep.subr.mxu0 0.0
        %1065 = vmatpush2.msra.mxu0 0.0
        %1066 = vmatprep.subr.mxu0 0.0
        %1067 = vmatpush2.msra.mxu0 0.0
        %1068 = vmatprep.subr.mxu0 0.0
        %1069 = vmatpush2.msra.mxu0 0.0
        %1070 = vmatprep.subr.mxu0 0.0
        %1071 = vmatpush2.msra.mxu0 0.0
        %1072 = vmatprep.mubr.f32.mxu0 0.0
        %1073 = vmatmul.mubr.f32.gmra.mxu0 %v1006
        %v1074 = vpop.f32.mrf.mxu0
        %v1075 = vadd.f32 0.0, %v1074
        %v1076 = vpop.f32.mrf.mxu0
        %1077 = vdwg.mxu0
        %v1078 = vrcp.pop %v1004
        %v1079 = vmul.f32 %v1004, %v1078
        %v1080 = vsub.f32 2.0, %v1079
        %v1081 = vmul.f32 %v1078, %v1080
        %v1082 = vmul.f32 %v1075, %v1081
        %1083 = vst.msk [vmem:[#allocation4] sm:$0xff] %vm918, %v1082
        %v1084 = vld [vmem:[#allocation2] sm:$0xff]
        %v1085 = vld [vmem:[#allocation3] sm:$0xff]
        %1086 = vrot.lane.b32.xlu0 %v897, 120
        %v1087 = vpop.permute.xlu0 %1086
        %1089 = vrot.lane.b32.xlu0 %v1084, 120
        %v1090 = vpop.permute.xlu0 %1089
        %v1091 = vsel %vm918, %v1087, 0
        %v1093 = vsel %vm918, %v1090, 0
        %1095 = vmatprep.subr.mxu0 0.0
        %1096 = vmatpush1.xpose.msra.mxu0 0.0
        %1097 = vmatprep.subr.mxu0 0.0
        %1098 = vmatpush1.xpose.msra.mxu0 0.0
        %1099 = vmatprep.subr.mxu0 0.0
        %1100 = vmatpush1.xpose.msra.mxu0 0.0
        %1101 = vmatprep.subr.mxu0 0.0
        %1102 = vmatpush1.xpose.msra.mxu0 0.0
        %1103 = vmatprep.subr.mxu0 0.0
        %1104 = vmatpush1.xpose.msra.mxu0 0.0
        %1105 = vmatprep.subr.mxu0 0.0
        %1106 = vmatpush1.xpose.msra.mxu0 0.0
        %1107 = vmatprep.subr.mxu0 0.0
        %1108 = vmatpush1.xpose.msra.mxu0 0.0
        %1109 = vmatprep.subr.mxu0 0.0
        %1110 = vmatpush1.xpose.msra.mxu0 0.0
        %1111 = vmatprep.subr.mxu0 0.0
        %1112 = vmatpush1.xpose.msra.mxu0 0.0
        %1113 = vmatprep.subr.mxu0 0.0
        %1114 = vmatpush1.xpose.msra.mxu0 0.0
        %1115 = vmatprep.subr.mxu0 0.0
        %1116 = vmatpush1.xpose.msra.mxu0 0.0
        %1117 = vmatprep.subr.mxu0 0.0
        %1118 = vmatpush1.xpose.msra.mxu0 0.0
        %1119 = vmatprep.subr.mxu0 0.0
        %1120 = vmatpush1.xpose.msra.mxu0 0.0
        %1121 = vmatprep.subr.mxu0 0.0
        %1122 = vmatpush1.xpose.msra.mxu0 0.0
        %1123 = vmatprep.subr.mxu0 0.0
        %1124 = vmatpush1.xpose.msra.mxu0 0.0
        %1125 = vmatprep.subr.mxu0 0.0
        %1126 = vmatpush1.xpose.msra.mxu0 %v1093
        %1127 = vmatprep.subr.mxu0 0.0
        %1128 = vmatpush2.xpose.msra.mxu0 0.0
        %1129 = vmatprep.subr.mxu0 0.0
        %1130 = vmatpush2.xpose.msra.mxu0 0.0
        %1131 = vmatprep.subr.mxu0 0.0
        %1132 = vmatpush2.xpose.msra.mxu0 0.0
        %1133 = vmatprep.subr.mxu0 0.0
        %1134 = vmatpush2.xpose.msra.mxu0 0.0
        %1135 = vmatprep.subr.mxu0 0.0
        %1136 = vmatpush2.xpose.msra.mxu0 0.0
        %1137 = vmatprep.subr.mxu0 0.0
        %1138 = vmatpush2.xpose.msra.mxu0 0.0
        %1139 = vmatprep.subr.mxu0 0.0
        %1140 = vmatpush2.xpose.msra.mxu0 0.0
        %1141 = vmatprep.subr.mxu0 0.0
        %1142 = vmatpush2.xpose.msra.mxu0 0.0
        %1143 = vmatprep.subr.mxu0 0.0
        %1144 = vmatpush2.xpose.msra.mxu0 0.0
        %1145 = vmatprep.subr.mxu0 0.0
        %1146 = vmatpush2.xpose.msra.mxu0 0.0
        %1147 = vmatprep.subr.mxu0 0.0
        %1148 = vmatpush2.xpose.msra.mxu0 0.0
        %1149 = vmatprep.subr.mxu0 0.0
        %1150 = vmatpush2.xpose.msra.mxu0 0.0
        %1151 = vmatprep.subr.mxu0 0.0
        %1152 = vmatpush2.xpose.msra.mxu0 0.0
        %1153 = vmatprep.subr.mxu0 0.0
        %1154 = vmatpush2.xpose.msra.mxu0 0.0
        %1155 = vmatprep.subr.mxu0 0.0
        %1156 = vmatpush2.xpose.msra.mxu0 0.0
        %1157 = vmatprep.subr.mxu0 0.0
        %1158 = vmatpush2.xpose.msra.mxu0 0.0
        %1159 = vmatprep.mubr.f32.mxu0 0.0
        %1160 = vmatmul.mubr.f32.gmra.mxu0 %v1091
        %v1161 = vpop.f32.mrf.mxu0
        %v1162 = vadd.f32 0.0, %v1161
        %v1163 = vpop.f32.mrf.mxu0
        %1164 = vdwg.mxu0
        %v1165 = vsel %vm915, %v1162, -1e+09
        %v1166 = vsel %vm918, %v1165, -inf
        %1167 = vmax.xlane.f32.xlu0 %v1166
        %v1168 = vpop.xlane.xlu0 %1167
        %v1169 = vsub.f32 %v1165, %v1168
        %v1170 = vmul.f32 %v1169, 1.442695
        %v1171 = vpow.pop %v1170
        %v1172 = vsel %vm918, %v1171, 0.0
        %1173 = vadd.xlane.f32.xlu0 %v1172
        %v1174 = vpop.xlane.xlu0 %1173
        %1176 = vrot.lane.b32.xlu0 %v1085, 120
        %v1177 = vpop.permute.xlu0 %1176
        %v1180 = vsel %vm918, %v1171, 0
        %1182 = vmatprep.subr.mxu0 0.0
        %1183 = vmatpush1.msra.mxu0 0.0
        %1184 = vmatprep.subr.mxu0 0.0
        %1185 = vmatpush1.msra.mxu0 0.0
        %1186 = vmatprep.subr.mxu0 0.0
        %1187 = vmatpush1.msra.mxu0 0.0
        %1188 = vmatprep.subr.mxu0 0.0
        %1189 = vmatpush1.msra.mxu0 0.0
        %1190 = vmatprep.subr.mxu0 0.0
        %1191 = vmatpush1.msra.mxu0 0.0
        %1192 = vmatprep.subr.mxu0 0.0
        %1193 = vmatpush1.msra.mxu0 0.0
        %1194 = vmatprep.subr.mxu0 0.0
        %1195 = vmatpush1.msra.mxu0 0.0
        %1196 = vmatprep.subr.mxu0 0.0
        %1197 = vmatpush1.msra.mxu0 0.0
        %1198 = vmatprep.subr.mxu0 0.0
        %1199 = vmatpush1.msra.mxu0 0.0
        %1200 = vmatprep.subr.mxu0 0.0
        %1201 = vmatpush1.msra.mxu0 0.0
        %1202 = vmatprep.subr.mxu0 0.0
        %1203 = vmatpush1.msra.mxu0 0.0
        %1204 = vmatprep.subr.mxu0 0.0
        %1205 = vmatpush1.msra.mxu0 0.0
        %1206 = vmatprep.subr.mxu0 0.0
        %1207 = vmatpush1.msra.mxu0 0.0
        %1208 = vmatprep.subr.mxu0 0.0
        %1209 = vmatpush1.msra.mxu0 0.0
        %1210 = vmatprep.subr.mxu0 0.0
        %1211 = vmatpush1.msra.mxu0 0.0
        %1212 = vmatprep.subr.mxu0 0.0
        %1213 = vmatpush1.msra.mxu0 %v1177
        %1214 = vmatprep.subr.mxu0 0.0
        %1215 = vmatpush2.msra.mxu0 0.0
        %1216 = vmatprep.subr.mxu0 0.0
        %1217 = vmatpush2.msra.mxu0 0.0
        %1218 = vmatprep.subr.mxu0 0.0
        %1219 = vmatpush2.msra.mxu0 0.0
        %1220 = vmatprep.subr.mxu0 0.0
        %1221 = vmatpush2.msra.mxu0 0.0
        %1222 = vmatprep.subr.mxu0 0.0
        %1223 = vmatpush2.msra.mxu0 0.0
        %1224 = vmatprep.subr.mxu0 0.0
        %1225 = vmatpush2.msra.mxu0 0.0
        %1226 = vmatprep.subr.mxu0 0.0
        %1227 = vmatpush2.msra.mxu0 0.0
        %1228 = vmatprep.subr.mxu0 0.0
        %1229 = vmatpush2.msra.mxu0 0.0
        %1230 = vmatprep.subr.mxu0 0.0
        %1231 = vmatpush2.msra.mxu0 0.0
        %1232 = vmatprep.subr.mxu0 0.0
        %1233 = vmatpush2.msra.mxu0 0.0
        %1234 = vmatprep.subr.mxu0 0.0
        %1235 = vmatpush2.msra.mxu0 0.0
        %1236 = vmatprep.subr.mxu0 0.0
        %1237 = vmatpush2.msra.mxu0 0.0
        %1238 = vmatprep.subr.mxu0 0.0
        %1239 = vmatpush2.msra.mxu0 0.0
        %1240 = vmatprep.subr.mxu0 0.0
        %1241 = vmatpush2.msra.mxu0 0.0
        %1242 = vmatprep.subr.mxu0 0.0
        %1243 = vmatpush2.msra.mxu0 0.0
        %1244 = vmatprep.subr.mxu0 0.0
        %1245 = vmatpush2.msra.mxu0 0.0
        %1246 = vmatprep.mubr.f32.mxu0 0.0
        %1247 = vmatmul.mubr.f32.gmra.mxu0 %v1180
        %v1248 = vpop.f32.mrf.mxu0
        %v1249 = vadd.f32 0.0, %v1248
        %v1250 = vpop.f32.mrf.mxu0
        %1251 = vdwg.mxu0
        %v1252 = vrcp.pop %v1174
        %v1253 = vmul.f32 %v1174, %v1252
        %v1254 = vsub.f32 2.0, %v1253
        %v1255 = vmul.f32 %v1252, %v1254
        %v1256 = vmul.f32 %v1249, %v1255
        %1258 = vrot.lane.b32.xlu0 %v1256, 8
        %v1259 = vpop.permute.xlu0 %1258
        %vm1261 = vcmask 130112
        %1262 = vst.msk [vmem:[#allocation4] sm:$0xff] %vm1261, %v1259
        %v1263 = vld [vmem:[#allocation2] sm:$0xff]
        %v1264 = vld [vmem:[#allocation3] sm:$0xff]
        %1265 = vrot.lane.b32.xlu0 %v897, 112
        %v1266 = vpop.permute.xlu0 %1265
        %1268 = vrot.lane.b32.xlu0 %v1263, 112
        %v1269 = vpop.permute.xlu0 %1268
        %v1270 = vsel %vm918, %v1266, 0
        %v1272 = vsel %vm918, %v1269, 0
        %1274 = vmatprep.subr.mxu0 0.0
        %1275 = vmatpush1.xpose.msra.mxu0 0.0
        %1276 = vmatprep.subr.mxu0 0.0
        %1277 = vmatpush1.xpose.msra.mxu0 0.0
        %1278 = vmatprep.subr.mxu0 0.0
        %1279 = vmatpush1.xpose.msra.mxu0 0.0
        %1280 = vmatprep.subr.mxu0 0.0
        %1281 = vmatpush1.xpose.msra.mxu0 0.0
        %1282 = vmatprep.subr.mxu0 0.0
        %1283 = vmatpush1.xpose.msra.mxu0 0.0
        %1284 = vmatprep.subr.mxu0 0.0
        %1285 = vmatpush1.xpose.msra.mxu0 0.0
        %1286 = vmatprep.subr.mxu0 0.0
        %1287 = vmatpush1.xpose.msra.mxu0 0.0
        %1288 = vmatprep.subr.mxu0 0.0
        %1289 = vmatpush1.xpose.msra.mxu0 0.0
        %1290 = vmatprep.subr.mxu0 0.0
        %1291 = vmatpush1.xpose.msra.mxu0 0.0
        %1292 = vmatprep.subr.mxu0 0.0
        %1293 = vmatpush1.xpose.msra.mxu0 0.0
        %1294 = vmatprep.subr.mxu0 0.0
        %1295 = vmatpush1.xpose.msra.mxu0 0.0
        %1296 = vmatprep.subr.mxu0 0.0
        %1297 = vmatpush1.xpose.msra.mxu0 0.0
        %1298 = vmatprep.subr.mxu0 0.0
        %1299 = vmatpush1.xpose.msra.mxu0 0.0
        %1300 = vmatprep.subr.mxu0 0.0
        %1301 = vmatpush1.xpose.msra.mxu0 0.0
        %1302 = vmatprep.subr.mxu0 0.0
        %1303 = vmatpush1.xpose.msra.mxu0 0.0
        %1304 = vmatprep.subr.mxu0 0.0
        %1305 = vmatpush1.xpose.msra.mxu0 %v1272
        %1306 = vmatprep.subr.mxu0 0.0
        %1307 = vmatpush2.xpose.msra.mxu0 0.0
        %1308 = vmatprep.subr.mxu0 0.0
        %1309 = vmatpush2.xpose.msra.mxu0 0.0
        %1310 = vmatprep.subr.mxu0 0.0
        %1311 = vmatpush2.xpose.msra.mxu0 0.0
        %1312 = vmatprep.subr.mxu0 0.0
        %1313 = vmatpush2.xpose.msra.mxu0 0.0
        %1314 = vmatprep.subr.mxu0 0.0
        %1315 = vmatpush2.xpose.msra.mxu0 0.0
        %1316 = vmatprep.subr.mxu0 0.0
        %1317 = vmatpush2.xpose.msra.mxu0 0.0
        %1318 = vmatprep.subr.mxu0 0.0
        %1319 = vmatpush2.xpose.msra.mxu0 0.0
        %1320 = vmatprep.subr.mxu0 0.0
        %1321 = vmatpush2.xpose.msra.mxu0 0.0
        %1322 = vmatprep.subr.mxu0 0.0
        %1323 = vmatpush2.xpose.msra.mxu0 0.0
        %1324 = vmatprep.subr.mxu0 0.0
        %1325 = vmatpush2.xpose.msra.mxu0 0.0
        %1326 = vmatprep.subr.mxu0 0.0
        %1327 = vmatpush2.xpose.msra.mxu0 0.0
        %1328 = vmatprep.subr.mxu0 0.0
        %1329 = vmatpush2.xpose.msra.mxu0 0.0
        %1330 = vmatprep.subr.mxu0 0.0
        %1331 = vmatpush2.xpose.msra.mxu0 0.0
        %1332 = vmatprep.subr.mxu0 0.0
        %1333 = vmatpush2.xpose.msra.mxu0 0.0
        %1334 = vmatprep.subr.mxu0 0.0
        %1335 = vmatpush2.xpose.msra.mxu0 0.0
        %1336 = vmatprep.subr.mxu0 0.0
        %1337 = vmatpush2.xpose.msra.mxu0 0.0
        %1338 = vmatprep.mubr.f32.mxu0 0.0
        %1339 = vmatmul.mubr.f32.gmra.mxu0 %v1270
        %v1340 = vpop.f32.mrf.mxu0
        %v1341 = vadd.f32 0.0, %v1340
        %v1342 = vpop.f32.mrf.mxu0
        %1343 = vdwg.mxu0
        %v1344 = vsel %vm915, %v1341, -1e+09
        %v1345 = vsel %vm918, %v1344, -inf
        %1346 = vmax.xlane.f32.xlu0 %v1345
        %v1347 = vpop.xlane.xlu0 %1346
        %v1348 = vsub.f32 %v1344, %v1347
        %v1349 = vmul.f32 %v1348, 1.442695
        %v1350 = vpow.pop %v1349
        %v1351 = vsel %vm918, %v1350, 0.0
        %1352 = vadd.xlane.f32.xlu0 %v1351
        %v1353 = vpop.xlane.xlu0 %1352
        %1355 = vrot.lane.b32.xlu0 %v1264, 112
        %v1356 = vpop.permute.xlu0 %1355
        %v1359 = vsel %vm918, %v1350, 0
        %1361 = vmatprep.subr.mxu0 0.0
        %1362 = vmatpush1.msra.mxu0 0.0
        %1363 = vmatprep.subr.mxu0 0.0
        %1364 = vmatpush1.msra.mxu0 0.0
        %1365 = vmatprep.subr.mxu0 0.0
        %1366 = vmatpush1.msra.mxu0 0.0
        %1367 = vmatprep.subr.mxu0 0.0
        %1368 = vmatpush1.msra.mxu0 0.0
        %1369 = vmatprep.subr.mxu0 0.0
        %1370 = vmatpush1.msra.mxu0 0.0
        %1371 = vmatprep.subr.mxu0 0.0
        %1372 = vmatpush1.msra.mxu0 0.0
        %1373 = vmatprep.subr.mxu0 0.0
        %1374 = vmatpush1.msra.mxu0 0.0
        %1375 = vmatprep.subr.mxu0 0.0
        %1376 = vmatpush1.msra.mxu0 0.0
        %1377 = vmatprep.subr.mxu0 0.0
        %1378 = vmatpush1.msra.mxu0 0.0
        %1379 = vmatprep.subr.mxu0 0.0
        %1380 = vmatpush1.msra.mxu0 0.0
        %1381 = vmatprep.subr.mxu0 0.0
        %1382 = vmatpush1.msra.mxu0 0.0
        %1383 = vmatprep.subr.mxu0 0.0
        %1384 = vmatpush1.msra.mxu0 0.0
        %1385 = vmatprep.subr.mxu0 0.0
        %1386 = vmatpush1.msra.mxu0 0.0
        %1387 = vmatprep.subr.mxu0 0.0
        %1388 = vmatpush1.msra.mxu0 0.0
        %1389 = vmatprep.subr.mxu0 0.0
        %1390 = vmatpush1.msra.mxu0 0.0
        %1391 = vmatprep.subr.mxu0 0.0
        %1392 = vmatpush1.msra.mxu0 %v1356
        %1393 = vmatprep.subr.mxu0 0.0
        %1394 = vmatpush2.msra.mxu0 0.0
        %1395 = vmatprep.subr.mxu0 0.0
        %1396 = vmatpush2.msra.mxu0 0.0
        %1397 = vmatprep.subr.mxu0 0.0
        %1398 = vmatpush2.msra.mxu0 0.0
        %1399 = vmatprep.subr.mxu0 0.0
        %1400 = vmatpush2.msra.mxu0 0.0
        %1401 = vmatprep.subr.mxu0 0.0
        %1402 = vmatpush2.msra.mxu0 0.0
        %1403 = vmatprep.subr.mxu0 0.0
        %1404 = vmatpush2.msra.mxu0 0.0
        %1405 = vmatprep.subr.mxu0 0.0
        %1406 = vmatpush2.msra.mxu0 0.0
        %1407 = vmatprep.subr.mxu0 0.0
        %1408 = vmatpush2.msra.mxu0 0.0
        %1409 = vmatprep.subr.mxu0 0.0
        %1410 = vmatpush2.msra.mxu0 0.0
        %1411 = vmatprep.subr.mxu0 0.0
        %1412 = vmatpush2.msra.mxu0 0.0
        %1413 = vmatprep.subr.mxu0 0.0
        %1414 = vmatpush2.msra.mxu0 0.0
        %1415 = vmatprep.subr.mxu0 0.0
        %1416 = vmatpush2.msra.mxu0 0.0
        %1417 = vmatprep.subr.mxu0 0.0
        %1418 = vmatpush2.msra.mxu0 0.0
        %1419 = vmatprep.subr.mxu0 0.0
        %1420 = vmatpush2.msra.mxu0 0.0
        %1421 = vmatprep.subr.mxu0 0.0
        %1422 = vmatpush2.msra.mxu0 0.0
        %1423 = vmatprep.subr.mxu0 0.0
        %1424 = vmatpush2.msra.mxu0 0.0
        %1425 = vmatprep.mubr.f32.mxu0 0.0
        %1426 = vmatmul.mubr.f32.gmra.mxu0 %v1359
        %v1427 = vpop.f32.mrf.mxu0
        %v1428 = vadd.f32 0.0, %v1427
        %v1429 = vpop.f32.mrf.mxu0
        %1430 = vdwg.mxu0
        %v1431 = vrcp.pop %v1353
        %v1432 = vmul.f32 %v1353, %v1431
        %v1433 = vsub.f32 2.0, %v1432
        %v1434 = vmul.f32 %v1431, %v1433
        %v1435 = vmul.f32 %v1428, %v1434
        %1437 = vrot.lane.b32.xlu0 %v1435, 16
        %v1438 = vpop.permute.xlu0 %1437
        %vm1440 = vcmask 195712
        %1441 = vst.msk [vmem:[#allocation4] sm:$0xff] %vm1440, %v1438
        %v1442 = vld [vmem:[#allocation2] sm:$0xff]
        %v1443 = vld [vmem:[#allocation3] sm:$0xff]
        %1444 = vrot.lane.b32.xlu0 %v897, 104
        %v1445 = vpop.permute.xlu0 %1444
        %1447 = vrot.lane.b32.xlu0 %v1442, 104
        %v1448 = vpop.permute.xlu0 %1447
        %v1449 = vsel %vm918, %v1445, 0
        %v1451 = vsel %vm918, %v1448, 0
        %1453 = vmatprep.subr.mxu0 0.0
        %1454 = vmatpush1.xpose.msra.mxu0 0.0
        %1455 = vmatprep.subr.mxu0 0.0
        %1456 = vmatpush1.xpose.msra.mxu0 0.0
        %1457 = vmatprep.subr.mxu0 0.0
        %1458 = vmatpush1.xpose.msra.mxu0 0.0
        %1459 = vmatprep.subr.mxu0 0.0
        %1460 = vmatpush1.xpose.msra.mxu0 0.0
        %1461 = vmatprep.subr.mxu0 0.0
        %1462 = vmatpush1.xpose.msra.mxu0 0.0
        %1463 = vmatprep.subr.mxu0 0.0
        %1464 = vmatpush1.xpose.msra.mxu0 0.0
        %1465 = vmatprep.subr.mxu0 0.0
        %1466 = vmatpush1.xpose.msra.mxu0 0.0
        %1467 = vmatprep.subr.mxu0 0.0
        %1468 = vmatpush1.xpose.msra.mxu0 0.0
        %1469 = vmatprep.subr.mxu0 0.0
        %1470 = vmatpush1.xpose.msra.mxu0 0.0
        %1471 = vmatprep.subr.mxu0 0.0
        %1472 = vmatpush1.xpose.msra.mxu0 0.0
        %1473 = vmatprep.subr.mxu0 0.0
        %1474 = vmatpush1.xpose.msra.mxu0 0.0
        %1475 = vmatprep.subr.mxu0 0.0
        %1476 = vmatpush1.xpose.msra.mxu0 0.0
        %1477 = vmatprep.subr.mxu0 0.0
        %1478 = vmatpush1.xpose.msra.mxu0 0.0
        %1479 = vmatprep.subr.mxu0 0.0
        %1480 = vmatpush1.xpose.msra.mxu0 0.0
        %1481 = vmatprep.subr.mxu0 0.0
        %1482 = vmatpush1.xpose.msra.mxu0 0.0
        %1483 = vmatprep.subr.mxu0 0.0
        %1484 = vmatpush1.xpose.msra.mxu0 %v1451
        %1485 = vmatprep.subr.mxu0 0.0
        %1486 = vmatpush2.xpose.msra.mxu0 0.0
        %1487 = vmatprep.subr.mxu0 0.0
        %1488 = vmatpush2.xpose.msra.mxu0 0.0
        %1489 = vmatprep.subr.mxu0 0.0
        %1490 = vmatpush2.xpose.msra.mxu0 0.0
        %1491 = vmatprep.subr.mxu0 0.0
        %1492 = vmatpush2.xpose.msra.mxu0 0.0
        %1493 = vmatprep.subr.mxu0 0.0
        %1494 = vmatpush2.xpose.msra.mxu0 0.0
        %1495 = vmatprep.subr.mxu0 0.0
        %1496 = vmatpush2.xpose.msra.mxu0 0.0
        %1497 = vmatprep.subr.mxu0 0.0
        %1498 = vmatpush2.xpose.msra.mxu0 0.0
        %1499 = vmatprep.subr.mxu0 0.0
        %1500 = vmatpush2.xpose.msra.mxu0 0.0
        %1501 = vmatprep.subr.mxu0 0.0
        %1502 = vmatpush2.xpose.msra.mxu0 0.0
        %1503 = vmatprep.subr.mxu0 0.0
        %1504 = vmatpush2.xpose.msra.mxu0 0.0
        %1505 = vmatprep.subr.mxu0 0.0
        %1506 = vmatpush2.xpose.msra.mxu0 0.0
        %1507 = vmatprep.subr.mxu0 0.0
        %1508 = vmatpush2.xpose.msra.mxu0 0.0
        %1509 = vmatprep.subr.mxu0 0.0
        %1510 = vmatpush2.xpose.msra.mxu0 0.0
        %1511 = vmatprep.subr.mxu0 0.0
        %1512 = vmatpush2.xpose.msra.mxu0 0.0
        %1513 = vmatprep.subr.mxu0 0.0
        %1514 = vmatpush2.xpose.msra.mxu0 0.0
        %1515 = vmatprep.subr.mxu0 0.0
        %1516 = vmatpush2.xpose.msra.mxu0 0.0
        %1517 = vmatprep.mubr.f32.mxu0 0.0
        %1518 = vmatmul.mubr.f32.gmra.mxu0 %v1449
        %v1519 = vpop.f32.mrf.mxu0
        %v1520 = vadd.f32 0.0, %v1519
        %v1521 = vpop.f32.mrf.mxu0
        %1522 = vdwg.mxu0
        %v1523 = vsel %vm915, %v1520, -1e+09
        %v1524 = vsel %vm918, %v1523, -inf
        %1525 = vmax.xlane.f32.xlu0 %v1524
        %v1526 = vpop.xlane.xlu0 %1525
        %v1527 = vsub.f32 %v1523, %v1526
        %v1528 = vmul.f32 %v1527, 1.442695
        %v1529 = vpow.pop %v1528
        %v1530 = vsel %vm918, %v1529, 0.0
        %1531 = vadd.xlane.f32.xlu0 %v1530
        %v1532 = vpop.xlane.xlu0 %1531
        %1534 = vrot.lane.b32.xlu0 %v1443, 104
        %v1535 = vpop.permute.xlu0 %1534
        %v1538 = vsel %vm918, %v1529, 0
        %1540 = vmatprep.subr.mxu0 0.0
        %1541 = vmatpush1.msra.mxu0 0.0
        %1542 = vmatprep.subr.mxu0 0.0
        %1543 = vmatpush1.msra.mxu0 0.0
        %1544 = vmatprep.subr.mxu0 0.0
        %1545 = vmatpush1.msra.mxu0 0.0
        %1546 = vmatprep.subr.mxu0 0.0
        %1547 = vmatpush1.msra.mxu0 0.0
        %1548 = vmatprep.subr.mxu0 0.0
        %1549 = vmatpush1.msra.mxu0 0.0
        %1550 = vmatprep.subr.mxu0 0.0
        %1551 = vmatpush1.msra.mxu0 0.0
        %1552 = vmatprep.subr.mxu0 0.0
        %1553 = vmatpush1.msra.mxu0 0.0
        %1554 = vmatprep.subr.mxu0 0.0
        %1555 = vmatpush1.msra.mxu0 0.0
        %1556 = vmatprep.subr.mxu0 0.0
        %1557 = vmatpush1.msra.mxu0 0.0
        %1558 = vmatprep.subr.mxu0 0.0
        %1559 = vmatpush1.msra.mxu0 0.0
        %1560 = vmatprep.subr.mxu0 0.0
        %1561 = vmatpush1.msra.mxu0 0.0
        %1562 = vmatprep.subr.mxu0 0.0
        %1563 = vmatpush1.msra.mxu0 0.0
        %1564 = vmatprep.subr.mxu0 0.0
        %1565 = vmatpush1.msra.mxu0 0.0
        %1566 = vmatprep.subr.mxu0 0.0
        %1567 = vmatpush1.msra.mxu0 0.0
        %1568 = vmatprep.subr.mxu0 0.0
        %1569 = vmatpush1.msra.mxu0 0.0
        %1570 = vmatprep.subr.mxu0 0.0
        %1571 = vmatpush1.msra.mxu0 %v1535
        %1572 = vmatprep.subr.mxu0 0.0
        %1573 = vmatpush2.msra.mxu0 0.0
        %1574 = vmatprep.subr.mxu0 0.0
        %1575 = vmatpush2.msra.mxu0 0.0
        %1576 = vmatprep.subr.mxu0 0.0
        %1577 = vmatpush2.msra.mxu0 0.0
        %1578 = vmatprep.subr.mxu0 0.0
        %1579 = vmatpush2.msra.mxu0 0.0
        %1580 = vmatprep.subr.mxu0 0.0
        %1581 = vmatpush2.msra.mxu0 0.0
        %1582 = vmatprep.subr.mxu0 0.0
        %1583 = vmatpush2.msra.mxu0 0.0
        %1584 = vmatprep.subr.mxu0 0.0
        %1585 = vmatpush2.msra.mxu0 0.0
        %1586 = vmatprep.subr.mxu0 0.0
        %1587 = vmatpush2.msra.mxu0 0.0
        %1588 = vmatprep.subr.mxu0 0.0
        %1589 = vmatpush2.msra.mxu0 0.0
        %1590 = vmatprep.subr.mxu0 0.0
        %1591 = vmatpush2.msra.mxu0 0.0
        %1592 = vmatprep.subr.mxu0 0.0
        %1593 = vmatpush2.msra.mxu0 0.0
        %1594 = vmatprep.subr.mxu0 0.0
        %1595 = vmatpush2.msra.mxu0 0.0
        %1596 = vmatprep.subr.mxu0 0.0
        %1597 = vmatpush2.msra.mxu0 0.0
        %1598 = vmatprep.subr.mxu0 0.0
        %1599 = vmatpush2.msra.mxu0 0.0
        %1600 = vmatprep.subr.mxu0 0.0
        %1601 = vmatpush2.msra.mxu0 0.0
        %1602 = vmatprep.subr.mxu0 0.0
        %1603 = vmatpush2.msra.mxu0 0.0
        %1604 = vmatprep.mubr.f32.mxu0 0.0
        %1605 = vmatmul.mubr.f32.gmra.mxu0 %v1538
        %v1606 = vpop.f32.mrf.mxu0
        %v1607 = vadd.f32 0.0, %v1606
        %v1608 = vpop.f32.mrf.mxu0
        %1609 = vdwg.mxu0
        %v1610 = vrcp.pop %v1532
        %v1611 = vmul.f32 %v1532, %v1610
        %v1612 = vsub.f32 2.0, %v1611
        %v1613 = vmul.f32 %v1610, %v1612
        %v1614 = vmul.f32 %v1607, %v1613
        %1616 = vrot.lane.b32.xlu0 %v1614, 24
        %v1617 = vpop.permute.xlu0 %1616
        %vm1619 = vcmask 261312
        %1620 = vst.msk [vmem:[#allocation4] sm:$0xff] %vm1619, %v1617
        %v1621 = vld [vmem:[#allocation4] sm:$0xff]
        %v1622 = vld [vmem:[%s8] sm:$0xff]
        %v1623 = vld [vmem:[%s8 + $0x8] sm:$0xff]
        %v1624 = vld [vmem:[%s8 + $0x10] sm:$0xff]
        %v1625 = vld [vmem:[%s8 + $0x18] sm:$0xff]
        %v1626 = vld [vmem:[%s9] sm:$0x1]
        %v1628 = vlaneseq
        %v1629 = vshrl.u32 %v1628, 7
        %v1630 = vsub.s32 0, %v1629
        %v1631 = vrot.slane %v1626, %v1630
        %v1634 = vsel %vm826, %v1621, 0
        %1636 = vmatprep.subr.mxu0 0.0
        %1637 = vmatpush1.msra.mxu0 0.0
        %1638 = vmatprep.subr.mxu0 0.0
        %1639 = vmatpush1.msra.mxu0 0.0
        %1640 = vmatprep.subr.mxu0 0.0
        %1641 = vmatpush1.msra.mxu0 0.0
        %1642 = vmatprep.subr.mxu0 0.0
        %1643 = vmatpush1.msra.mxu0 0.0
        %1644 = vmatprep.subr.mxu0 0.0
        %1645 = vmatpush1.msra.mxu0 0.0
        %1646 = vmatprep.subr.mxu0 0.0
        %1647 = vmatpush1.msra.mxu0 0.0
        %1648 = vmatprep.subr.mxu0 0.0
        %1649 = vmatpush1.msra.mxu0 0.0
        %1650 = vmatprep.subr.mxu0 0.0
        %1651 = vmatpush1.msra.mxu0 0.0
        %1652 = vmatprep.subr.mxu0 0.0
        %1653 = vmatpush1.msra.mxu0 0.0
        %1654 = vmatprep.subr.mxu0 0.0
        %1655 = vmatpush1.msra.mxu0 0.0
        %1656 = vmatprep.subr.mxu0 0.0
        %1657 = vmatpush1.msra.mxu0 0.0
        %1658 = vmatprep.subr.mxu0 0.0
        %1659 = vmatpush1.msra.mxu0 0.0
        %1660 = vmatprep.subr.mxu0 0.0
        %1661 = vmatpush1.msra.mxu0 %v1625
        %1662 = vmatprep.subr.mxu0 0.0
        %1663 = vmatpush1.msra.mxu0 %v1624
        %1664 = vmatprep.subr.mxu0 0.0
        %1665 = vmatpush1.msra.mxu0 %v1623
        %1666 = vmatprep.subr.mxu0 0.0
        %1667 = vmatpush1.msra.mxu0 %v1622
        %1668 = vmatprep.subr.mxu0 0.0
        %1669 = vmatpush2.msra.mxu0 0.0
        %1670 = vmatprep.subr.mxu0 0.0
        %1671 = vmatpush2.msra.mxu0 0.0
        %1672 = vmatprep.subr.mxu0 0.0
        %1673 = vmatpush2.msra.mxu0 0.0
        %1674 = vmatprep.subr.mxu0 0.0
        %1675 = vmatpush2.msra.mxu0 0.0
        %1676 = vmatprep.subr.mxu0 0.0
        %1677 = vmatpush2.msra.mxu0 0.0
        %1678 = vmatprep.subr.mxu0 0.0
        %1679 = vmatpush2.msra.mxu0 0.0
        %1680 = vmatprep.subr.mxu0 0.0
        %1681 = vmatpush2.msra.mxu0 0.0
        %1682 = vmatprep.subr.mxu0 0.0
        %1683 = vmatpush2.msra.mxu0 0.0
        %1684 = vmatprep.subr.mxu0 0.0
        %1685 = vmatpush2.msra.mxu0 0.0
        %1686 = vmatprep.subr.mxu0 0.0
        %1687 = vmatpush2.msra.mxu0 0.0
        %1688 = vmatprep.subr.mxu0 0.0
        %1689 = vmatpush2.msra.mxu0 0.0
        %1690 = vmatprep.subr.mxu0 0.0
        %1691 = vmatpush2.msra.mxu0 0.0
        %1692 = vmatprep.subr.mxu0 0.0
        %1693 = vmatpush2.msra.mxu0 0.0
        %1694 = vmatprep.subr.mxu0 0.0
        %1695 = vmatpush2.msra.mxu0 0.0
        %1696 = vmatprep.subr.mxu0 0.0
        %1697 = vmatpush2.msra.mxu0 0.0
        %1698 = vmatprep.subr.mxu0 0.0
        %1699 = vmatpush2.msra.mxu0 0.0
        %1700 = vmatprep.mubr.f32.mxu0 0.0
        %1701 = vmatmul.mubr.f32.gmra.mxu0 %v1634
        %v1702 = vpop.f32.mrf.mxu0
        %v1703 = vadd.f32 %v1631, %v1702
        %v1704 = vpop.f32.mrf.mxu0
        %1705 = vdwg.mxu0
        %v1706 = vadd.f32 %v814, %v1703
        %v1707 = vld [vmem:[%s10] sm:$0x1]
        %v1708 = vld [vmem:[%s11] sm:$0x1]
        %v1709 = vsel %vm826, %v1706, 0.0
        %1710 = vadd.xlane.f32.xlu0 %v1709
        %v1711 = vpop.xlane.xlu0 %1710
        %v1712 = vrcp.pop 32.0
        %v1713 = vmul.f32 %v1711, %v1712
        %v1714 = vsub.f32 %v1706, %v1713
        %v1715 = vmul.f32 %v1714, %v1714
        %v1716 = vsel %vm826, %v1715, 0.0
        %1717 = vadd.xlane.f32.xlu0 %v1716
        %v1718 = vpop.xlane.xlu0 %1717
        %v1719 = vmul.f32 %v1718, %v1712
        %v1720 = vadd.f32 %v1719, 1e-05
        %v1721 = vrsqrt.pop %v1720
        %v1722 = vmul.f32 %v1714, %v1721
        %v1724 = vlaneseq
        %v1725 = vshrl.u32 %v1724, 7
        %v1726 = vsub.s32 0, %v1725
        %v1727 = vrot.slane %v1707, %v1726
        %v1729 = vmul.f32 %v1727, %v1722
        %v1731 = vlaneseq
        %v1732 = vshrl.u32 %v1731, 7
        %v1733 = vsub.s32 0, %v1732
        %v1734 = vrot.slane %v1708, %v1733
        %v1736 = vadd.f32 %v1729, %v1734
        %v1737 = vld [vmem:[%s12] sm:$0xff]
        %v1738 = vld [vmem:[%s12 + $0x8] sm:$0xff]
        %v1739 = vld [vmem:[%s12 + $0x10] sm:$0xff]
        %v1740 = vld [vmem:[%s12 + $0x18] sm:$0xff]
        %v1741 = vld [vmem:[%s13] sm:$0x1]
        %v1743 = vlaneseq
        %v1744 = vshrl.u32 %v1743, 7
        %v1745 = vsub.s32 0, %v1744
        %v1746 = vrot.slane %v1741, %v1745
        %v1749 = vsel %vm826, %v1736, 0
        %1751 = vmatprep.subr.mxu0 0.0
        %1752 = vmatpush1.msra.mxu0 0.0
        %1753 = vmatprep.subr.mxu0 0.0
        %1754 = vmatpush1.msra.mxu0 0.0
        %1755 = vmatprep.subr.mxu0 0.0
        %1756 = vmatpush1.msra.mxu0 0.0
        %1757 = vmatprep.subr.mxu0 0.0
        %1758 = vmatpush1.msra.mxu0 0.0
        %1759 = vmatprep.subr.mxu0 0.0
        %1760 = vmatpush1.msra.mxu0 0.0
        %1761 = vmatprep.subr.mxu0 0.0
        %1762 = vmatpush1.msra.mxu0 0.0
        %1763 = vmatprep.subr.mxu0 0.0
        %1764 = vmatpush1.msra.mxu0 0.0
        %1765 = vmatprep.subr.mxu0 0.0
        %1766 = vmatpush1.msra.mxu0 0.0
        %1767 = vmatprep.subr.mxu0 0.0
        %1768 = vmatpush1.msra.mxu0 0.0
        %1769 = vmatprep.subr.mxu0 0.0
        %1770 = vmatpush1.msra.mxu0 0.0
        %1771 = vmatprep.subr.mxu0 0.0
        %1772 = vmatpush1.msra.mxu0 0.0
        %1773 = vmatprep.subr.mxu0 0.0
        %1774 = vmatpush1.msra.mxu0 0.0
        %1775 = vmatprep.subr.mxu0 0.0
        %1776 = vmatpush1.msra.mxu0 %v1740
        %1777 = vmatprep.subr.mxu0 0.0
        %1778 = vmatpush1.msra.mxu0 %v1739
        %1779 = vmatprep.subr.mxu0 0.0
        %1780 = vmatpush1.msra.mxu0 %v1738
        %1781 = vmatprep.subr.mxu0 0.0
        %1782 = vmatpush1.msra.mxu0 %v1737
        %1783 = vmatprep.subr.mxu0 0.0
        %1784 = vmatpush2.msra.mxu0 0.0
        %1785 = vmatprep.subr.mxu0 0.0
        %1786 = vmatpush2.msra.mxu0 0.0
        %1787 = vmatprep.subr.mxu0 0.0
        %1788 = vmatpush2.msra.mxu0 0.0
        %1789 = vmatprep.subr.mxu0 0.0
        %1790 = vmatpush2.msra.mxu0 0.0
        %1791 = vmatprep.subr.mxu0 0.0
        %1792 = vmatpush2.msra.mxu0 0.0
        %1793 = vmatprep.subr.mxu0 0.0
        %1794 = vmatpush2.msra.mxu0 0.0
        %1795 = vmatprep.subr.mxu0 0.0
        %1796 = vmatpush2.msra.mxu0 0.0
        %1797 = vmatprep.subr.mxu0 0.0
        %1798 = vmatpush2.msra.mxu0 0.0
        %1799 = vmatprep.subr.mxu0 0.0
        %1800 = vmatpush2.msra.mxu0 0.0
        %1801 = vmatprep.subr.mxu0 0.0
        %1802 = vmatpush2.msra.mxu0 0.0
        %1803 = vmatprep.subr.mxu0 0.0
        %1804 = vmatpush2.msra.mxu0 0.0
        %1805 = vmatprep.subr.mxu0 0.0
        %1806 = vmatpush2.msra.mxu0 0.0
        %1807 = vmatprep.subr.mxu0 0.0
        %1808 = vmatpush2.msra.mxu0 0.0
        %1809 = vmatprep.subr.mxu0 0.0
        %1810 = vmatpush2.msra.mxu0 0.0
        %1811 = vmatprep.subr.mxu0 0.0
        %1812 = vmatpush2.msra.mxu0 0.0
        %1813 = vmatprep.subr.mxu0 0.0
        %1814 = vmatpush2.msra.mxu0 0.0
        %1815 = vmatprep.mubr.f32.mxu0 0.0
        %1816 = vmatmul.mubr.f32.gmra.mxu0 %v1749
        %v1817 = vpop.f32.mrf.mxu0
        %v1818 = vadd.f32 %v1746, %v1817
        %v1819 = vpop.f32.mrf.mxu0
        %1820 = vdwg.mxu0
        %v1821 = vmul.f32 %v1818, 0.5
        %v1822 = vmul.f32 %v1818, %v1818
        %v1823 = vmul.f32 %v1818, %v1822
        %v1824 = vmul.f32 %v1823, 0.044715
        %v1825 = vadd.f32 %v1818, %v1824
        %v1826 = vmul.f32 %v1825, 0.7978846
        %v1827 = vtanh.pop %v1826
        %v1828 = vadd.f32 %v1827, 1.0
        %v1829 = vmul.f32 %v1821, %v1828
        %v1830 = vld [vmem:[%s14] sm:$0xff]
        %v1831 = vld [vmem:[%s14 + $0x8] sm:$0xff]
        %v1832 = vld [vmem:[%s14 + $0x10] sm:$0xff]
        %v1833 = vld [vmem:[%s14 + $0x18] sm:$0xff]
        %v1834 = vld [vmem:[%s14 + $0x20] sm:$0xff]
        %v1835 = vld [vmem:[%s14 + $0x28] sm:$0xff]
        %v1836 = vld [vmem:[%s14 + $0x30] sm:$0xff]
        %v1837 = vld [vmem:[%s14 + $0x38] sm:$0xff]
        %v1838 = vld [vmem:[%s14 + $0x40] sm:$0xff]
        %v1839 = vld [vmem:[%s14 + $0x48] sm:$0xff]
        %v1840 = vld [vmem:[%s14 + $0x50] sm:$0xff]
        %v1841 = vld [vmem:[%s14 + $0x58] sm:$0xff]
        %v1842 = vld [vmem:[%s14 + $0x60] sm:$0xff]
        %v1843 = vld [vmem:[%s14 + $0x68] sm:$0xff]
        %v1844 = vld [vmem:[%s14 + $0x70] sm:$0xff]
        %v1845 = vld [vmem:[%s14 + $0x78] sm:$0xff]
        %v1846 = vld [vmem:[%s15] sm:$0x1]
        %v1848 = vlaneseq
        %v1849 = vshrl.u32 %v1848, 7
        %v1850 = vsub.s32 0, %v1849
        %v1851 = vrot.slane %v1846, %v1850
        %1853 = vmatprep.subr.mxu0 0.0
        %1854 = vmatpush1.msra.mxu0 %v1845
        %1855 = vmatprep.subr.mxu0 0.0
        %1856 = vmatpush1.msra.mxu0 %v1844
        %1857 = vmatprep.subr.mxu0 0.0
        %1858 = vmatpush1.msra.mxu0 %v1843
        %1859 = vmatprep.subr.mxu0 0.0
        %1860 = vmatpush1.msra.mxu0 %v1842
        %1861 = vmatprep.subr.mxu0 0.0
        %1862 = vmatpush1.msra.mxu0 %v1841
        %1863 = vmatprep.subr.mxu0 0.0
        %1864 = vmatpush1.msra.mxu0 %v1840
        %1865 = vmatprep.subr.mxu0 0.0
        %1866 = vmatpush1.msra.mxu0 %v1839
        %1867 = vmatprep.subr.mxu0 0.0
        %1868 = vmatpush1.msra.mxu0 %v1838
        %1869 = vmatprep.subr.mxu0 0.0
        %1870 = vmatpush1.msra.mxu0 %v1837
        %1871 = vmatprep.subr.mxu0 0.0
        %1872 = vmatpush1.msra.mxu0 %v1836
        %1873 = vmatprep.subr.mxu0 0.0
        %1874 = vmatpush1.msra.mxu0 %v1835
        %1875 = vmatprep.subr.mxu0 0.0
        %1876 = vmatpush1.msra.mxu0 %v1834
        %1877 = vmatprep.subr.mxu0 0.0
        %1878 = vmatpush1.msra.mxu0 %v1833
        %1879 = vmatprep.subr.mxu0 0.0
        %1880 = vmatpush1.msra.mxu0 %v1832
        %1881 = vmatprep.subr.mxu0 0.0
        %1882 = vmatpush1.msra.mxu0 %v1831
        %1883 = vmatprep.subr.mxu0 0.0
        %1884 = vmatpush1.msra.mxu0 %v1830
        %1885 = vmatprep.subr.mxu0 0.0
        %1886 = vmatpush2.msra.mxu0 0.0
        %1887 = vmatprep.subr.mxu0 0.0
        %1888 = vmatpush2.msra.mxu0 0.0
        %1889 = vmatprep.subr.mxu0 0.0
        %1890 = vmatpush2.msra.mxu0 0.0
        %1891 = vmatprep.subr.mxu0 0.0
        %1892 = vmatpush2.msra.mxu0 0.0
        %1893 = vmatprep.subr.mxu0 0.0
        %1894 = vmatpush2.msra.mxu0 0.0
        %1895 = vmatprep.subr.mxu0 0.0
        %1896 = vmatpush2.msra.mxu0 0.0
        %1897 = vmatprep.subr.mxu0 0.0
        %1898 = vmatpush2.msra.mxu0 0.0
        %1899 = vmatprep.subr.mxu0 0.0
        %1900 = vmatpush2.msra.mxu0 0.0
        %1901 = vmatprep.subr.mxu0 0.0
        %1902 = vmatpush2.msra.mxu0 0.0
        %1903 = vmatprep.subr.mxu0 0.0
        %1904 = vmatpush2.msra.mxu0 0.0
        %1905 = vmatprep.subr.mxu0 0.0
        %1906 = vmatpush2.msra.mxu0 0.0
        %1907 = vmatprep.subr.mxu0 0.0
        %1908 = vmatpush2.msra.mxu0 0.0
        %1909 = vmatprep.subr.mxu0 0.0
        %1910 = vmatpush2.msra.mxu0 0.0
        %1911 = vmatprep.subr.mxu0 0.0
        %1912 = vmatpush2.msra.mxu0 0.0
        %1913 = vmatprep.subr.mxu0 0.0
        %1914 = vmatpush2.msra.mxu0 0.0
        %1915 = vmatprep.subr.mxu0 0.0
        %1916 = vmatpush2.msra.mxu0 0.0
        %1917 = vmatprep.mubr.f32.mxu0 0.0
        %1918 = vmatmul.mubr.f32.gmra.mxu0 %v1829
        %v1919 = vpop.f32.mrf.mxu0
        %v1920 = vadd.f32 %v1851, %v1919
        %v1921 = vpop.f32.mrf.mxu0
        %1922 = vdwg.mxu0
        %v1923 = vadd.f32 %v1736, %v1920
        %v1924 = vld [vmem:[%s16] sm:$0x1]
        %v1925 = vld [vmem:[%s17] sm:$0x1]
        %v1926 = vsel %vm826, %v1923, 0.0
        %1927 = vadd.xlane.f32.xlu0 %v1926
        %v1928 = vpop.xlane.xlu0 %1927
        %v1929 = vmul.f32 %v1928, %v1712
        %v1930 = vsub.f32 %v1923, %v1929
        %v1931 = vmul.f32 %v1930, %v1930
        %v1932 = vsel %vm826, %v1931, 0.0
        %1933 = vadd.xlane.f32.xlu0 %v1932
        %v1934 = vpop.xlane.xlu0 %1933
        %v1935 = vmul.f32 %v1934, %v1712
        %v1936 = vadd.f32 %v1935, 1e-05
        %v1937 = vrsqrt.pop %v1936
        %v1938 = vmul.f32 %v1930, %v1937
        %v1940 = vlaneseq
        %v1941 = vshrl.u32 %v1940, 7
        %v1942 = vsub.s32 0, %v1941
        %v1943 = vrot.slane %v1924, %v1942
        %v1945 = vmul.f32 %v1943, %v1938
        %v1947 = vlaneseq
        %v1948 = vshrl.u32 %v1947, 7
        %v1949 = vsub.s32 0, %v1948
        %v1950 = vrot.slane %v1925, %v1949
        %v1952 = vadd.f32 %v1945, %v1950
        %1953 = vst.msk [vmem:[%s638] sm:$0xff] %vm826, %v1952
        %s1954 = sand.u32 %s448, 1
        %s1955 = scalar_lea.sflag [#allocation7], %s1954
        %s1956 = sand.u32 %s448, 1
        %s1957 = smul.addr %s1956, 8
        %s1958 = scalar_lea.vmem [#allocation10], %s1957
        // Predicated region
        $region105: #{tpu_custom_call.1} parent=91 // pred_check
          %p1959 = pneg %p458
        $region106: #{tpu_custom_call.1} parent=91 // pred_check_branch
          %1961 = sbr.rel (%p1959) target = $region108
        $region107: #{tpu_custom_call.1} parent=91 // pred_region
          %s1963 = ssub.s32 128, 128
          %1964 = vsyncadd %s1955, %s1963
          %s1965 = sadd.s32 %s43, %s42
          %s1966 = smul.addr %s1965, 128
          %s1967 = scalar_lea.hbm %s18, %s1966
          %s1969 = sshll.u32 %s1958, 4
          %s1970 = int_to_ptr.vmem [resolvable:$true] %s1969
          %1972 = dma.vmem_to_hbm [thread:$0]  %s1970, 128, %s1967, %s1955
        $region108: #{tpu_custom_call.1} parent=91 // pred_fallthru
          _
      $region92: #{tpu_custom_call.1} parent=5 // pred_fallthru
        _
      %p1973 = scmp.le.s32.totalorder 2, %s33
      // Predicated region
      $region109: #{tpu_custom_call.1} parent=5 // pred_check
        %p1974 = pneg %p1973
      $region110: #{tpu_custom_call.1} parent=5 // pred_check_branch
        %1976 = sbr.rel (%p1974) target = $region112
      $region111: #{tpu_custom_call.1} parent=5 // pred_region
        %s1977 = ssub.s32 %s33, 2
        // Predicated region
        $region113: #{tpu_custom_call.1} parent=111 // pred_check
          %p1978 = pneg %p464
        $region114: #{tpu_custom_call.1} parent=111 // pred_check_branch
          %1980 = sbr.rel (%p1978) target = $region116
        $region115: #{tpu_custom_call.1} parent=111 // pred_region
          %s1981 = sand.u32 %s449, 1
          %s1982 = scalar_lea.sflag [#allocation7], %s1981
          %s1983 = sand.u32 %s449, 1
          %s1984 = smul.addr %s1983, 8
          %s1985 = scalar_lea.vmem [#allocation10], %s1984
          %1986 = dma.done %s1982, 128
        $region116: #{tpu_custom_call.1} parent=111 // pred_fallthru
          _
      $region112: #{tpu_custom_call.1} parent=5 // pred_fallthru
        _
    $region6: #{tpu_custom_call.1} parent=1 // loop_footer
      %s37 = sadd.s32 1, %s33
    $region7: #{tpu_custom_call.1} parent=1 // loop_footer_branch
      %32 = sbr.rel target = $region3
    $region8: #{tpu_custom_call.1} parent=1 // loop_exit
      _
    %1987 = vsyncpa [#allocation6], 1
    %s1988 = scalar_lea.sflag [#allocation6], 1
    %1989 = vsyncpa %s1988, 1
    %1990 = vsyncpa [#allocation9], 1
    %s1991 = scalar_lea.sflag [#allocation9], 1
    %1992 = vsyncpa %s1991, 1
    %1993 = vsyncpa [#allocation7], 1
    %s1994 = scalar_lea.sflag [#allocation7], 1
    %1995 = vsyncpa %s1994, 1

</llo_original>
